<compile_context>
chip_gen: v7x
topology: tpu7x:2x2x1
jax: 0.10.0
libtpu: 0.0.40
codegen_flags: <defaults>
</compile_context>

<pallas_src>
import jax
import jax.numpy as jnp
from jax.experimental import pallas as pl
from jax.experimental.pallas import tpu as pltpu


# ----------------------------- configuration --------------------------------
BATCH = 2
SEQ = 8
EMBED = 32
NUM_HEADS = 4
HEAD_DIM = EMBED // NUM_HEADS


# ------------------------------- kernel --------------------------------------
def siglip_attn_kernel(x_ref, w_ref, b_ref, out_ref, attn_ref):
    """Single invocation, whole problem resident in VMEM.

    x_ref:    (B*S, E)       hidden states with batch folded into rows
    w_ref:    (E, 4E)        [Wqkv (head-major columns) | Wo], (in, out) layout
    b_ref:    (1, 4E)        [bqkv (head-major) | bo]
    out_ref:  (B*S, E)       attention output (after out_proj)
    attn_ref: (B, H, S, S)   softmax attention weights
    """
    B, H, S, _ = attn_ref.shape
    E = x_ref.shape[-1]
    D = E // H
    scale = D ** (-0.5)

    x = x_ref[...]                                               # (B*S, E)
    w = w_ref[...]                                               # (E, 4E)
    b = b_ref[...]                                               # (1, 4E)

    # Fused Q/K/V projection: one lane-dense (B*S, 3E) MXU result.
    # Columns are head-major: head h owns lanes [h*3D, (h+1)*3D) = [q | k | v].
    qkv = (jnp.dot(x, w[:, :3 * E], preferred_element_type=jnp.float32)
           + b[:, :3 * E])                                       # (B*S, 3E)

    # Gather all heads into one merged (B*H) batch dim with only proven ops:
    # contiguous per-head lane slice -> leading split -> leading-axis stack.
    per_head = [qkv[:, h * 3 * D:(h + 1) * 3 * D].reshape(B, S, 3 * D)
                for h in range(H)]                               # H x (B, S, 3D)
    blob = jnp.stack(per_head, axis=1).reshape(B * H, S, 3 * D)  # (B*H, S, 3D)
    q = blob[:, :, :D]                                           # (B*H, S, D)
    k = blob[:, :, D:2 * D]                                      # (B*H, S, D)
    v = blob[:, :, 2 * D:]                                       # (B*H, S, D)

    # One batched QK^T over the merged (batch*head) dim.
    s = jnp.einsum('bqd,bkd->bqk', q, k,
                   preferred_element_type=jnp.float32) * scale   # (B*H, S, S)

    # Single f32 softmax over the last axis (matches torch softmax).
    s = s - jnp.max(s, axis=-1, keepdims=True)
    e = jnp.exp(s)
    p = e * pl.reciprocal(jnp.sum(e, axis=-1, keepdims=True), approx=False)

    # One batched PV product.
    ctx = jnp.einsum('bqk,bkd->bqd', p, v,
                     preferred_element_type=jnp.float32)         # (B*H, S, D)

    # Attention-probability store: only a leading-dim split is needed.
    attn_ref[...] = p.reshape(B, H, S, S).astype(attn_ref.dtype)

    # Re-interleave heads along the lane axis (head-major, as the reference's
    # transpose(1,2).reshape does) and fold batch back into rows for one
    # out-projection matmul.
    ctx_r = ctx.reshape(B, H, S, D)
    ctx2 = jnp.concatenate([ctx_r[:, h] for h in range(H)],
                           axis=-1).reshape(B * S, E)            # (B*S, E)
    out = (jnp.dot(ctx2, w[:, 3 * E:], preferred_element_type=jnp.float32)
           + b[:, 3 * E:])
    out_ref[...] = out.astype(out_ref.dtype)


# ------------------------------- wrapper --------------------------------------
def prepare_params(wq, bq, wk, bk, wv, bv, wo, bo):
    """One-time (param-load) prep, kept OUT of the per-call hot path.

    Transposes nn.Linear weights to (in, out), permutes the fused QKV columns
    to head-major order (head h -> [q_h | k_h | v_h], 3D contiguous lanes),
    and packs everything into a single (E, 4E) weight slab + (1, 4E) bias slab
    so the kernel has only 2 parameter DMAs.
    """
    E = wq.shape[0]
    H, D = NUM_HEADS, E // NUM_HEADS
    wq_h = wq.T.reshape(E, H, D)
    wk_h = wk.T.reshape(E, H, D)
    wv_h = wv.T.reshape(E, H, D)
    w_qkv = jnp.concatenate([wq_h, wk_h, wv_h], axis=2).reshape(E, 3 * E)
    b_qkv = jnp.concatenate([bq.reshape(H, D), bk.reshape(H, D),
                             bv.reshape(H, D)], axis=1).reshape(3 * E)
    w_slab = jnp.concatenate([w_qkv, wo.T], axis=1)              # (E, 4E)
    b_slab = jnp.concatenate([b_qkv, bo]).reshape(1, 4 * E)      # (1, 4E)
    return w_slab, b_slab


@jax.jit
def siglip_attention(hidden_states, w_slab, b_slab):
    """hidden_states: (B, S, E); params already prepared by prepare_params."""
    B, S, E = hidden_states.shape
    H, D = NUM_HEADS, HEAD_DIM
    x2 = hidden_states.reshape(B * S, E)     # free reshape in HBM

    cost = pl.CostEstimate(
        flops=(2 * B * S * E * 3 * E            # fused QKV projection
               + 4 * B * H * S * S * D          # QK^T and PV
               + 2 * B * S * E * E),            # out projection
        transcendentals=B * H * S * S,          # exp in softmax
        bytes_accessed=4 * (B * S * E           # x
                            + E * 4 * E + 4 * E  # weight + bias slabs
                            + B * S * E          # out
                            + B * H * S * S),    # attn weights
    )

    vmem = pltpu.MemorySpace.VMEM
    out2, attn_w = pl.pallas_call(
        siglip_attn_kernel,
        out_shape=(
            jax.ShapeDtypeStruct((B * S, E), hidden_states.dtype),
            jax.ShapeDtypeStruct((B, H, S, S), hidden_states.dtype),
        ),
        in_specs=[pl.BlockSpec(memory_space=vmem)] * 3,
        out_specs=(pl.BlockSpec(memory_space=vmem),
                   pl.BlockSpec(memory_space=vmem)),
        cost_estimate=cost,
    )(x2, w_slab, b_slab)

    return out2.reshape(B, S, E), attn_w


# ------------------------------ reference -------------------------------------
def siglip_attention_ref(x, wq, bq, wk, bk, wv, bv, wo, bo):
    B, S, E = x.shape
    H, D = NUM_HEADS, HEAD_DIM
    scale = D ** (-0.5)
    q = x @ wq.T + bq
    k = x @ wk.T + bk
    v = x @ wv.T + bv
    q = q.reshape(B, S, H, D).transpose(0, 2, 1, 3)
    k = k.reshape(B, S, H, D).transpose(0, 2, 1, 3)
    v = v.reshape(B, S, H, D).transpose(0, 2, 1, 3)
    s = jnp.einsum("bhqd,bhkd->bhqk", q, k) * scale
    p = jax.nn.softmax(s.astype(jnp.float32), axis=-1).astype(x.dtype)
    ctx = jnp.einsum("bhqk,bhkd->bhqd", p, v)
    ctx = ctx.transpose(0, 2, 1, 3).reshape(B, S, E)
    out = ctx @ wo.T + bo
    return out, p


# --------------------------------- main ---------------------------------------
if __name__ == "__main__":
    key = jax.random.PRNGKey(0)
    keys = jax.random.split(key, 9)

    x = jax.random.normal(keys[0], (BATCH, SEQ, EMBED), dtype=jnp.float32)

    # Deterministic synthetic parameters (PyTorch nn.Linear layout: (out, in)).
    init = lambda k, shape: (jax.random.normal(k, shape, dtype=jnp.float32)
                             * (1.0 / jnp.sqrt(EMBED)))
    wq = init(keys[1], (EMBED, EMBED)); bq = init(keys[2], (EMBED,))
    wk = init(keys[3], (EMBED, EMBED)); bk = init(keys[4], (EMBED,))
    wv = init(keys[5], (EMBED, EMBED)); bv = init(keys[6], (EMBED,))
    wo = init(keys[7], (EMBED, EMBED)); bo = init(keys[8], (EMBED,))

    # Param prep (fusion / head-major column permutation / slab packing)
    # happens once, outside the jitted per-call path.
    w_slab, b_slab = prepare_params(wq, bq, wk, bk, wv, bv, wo, bo)

    out, attn_w = siglip_attention(x, w_slab, b_slab)
    out = jax.block_until_ready(out)
    attn_w = jax.block_until_ready(attn_w)

    out_ref, attn_ref = siglip_attention_ref(x, wq, bq, wk, bk, wv, bv, wo, bo)
    assert out.shape == (BATCH, SEQ, EMBED)
    assert attn_w.shape == (BATCH, NUM_HEADS, SEQ, SEQ)
    assert jnp.allclose(out, out_ref, atol=1e-4, rtol=1e-4)
    assert jnp.allclose(attn_w, attn_ref, atol=1e-5, rtol=1e-5)

    print("KERNEL_OK")
</pallas_src>

<mosaic_0001>
module attributes {stable_mosaic.version = 11 : i64} {
  func.func @siglip_attn_kernel(%arg0: memref<16x32xf32, #tpu.memory_space<vmem>>, %arg1: memref<32x128xf32, #tpu.memory_space<vmem>>, %arg2: memref<1x128xf32, #tpu.memory_space<vmem>>, %arg3: memref<16x32xf32, #tpu.memory_space<vmem>>, %arg4: memref<2x4x8x8xf32, #tpu.memory_space<vmem>>) attributes {dimension_semantics = [], scalar_prefetch = 0 : i64, scratch_operands = 0 : i64, tpu.core_type = #tpu.core_type<tc>} {
    %c0 = arith.constant 0 : index
    %c0_0 = arith.constant 0 : index
    %0 = vector.load %arg0[%c0, %c0_0] : memref<16x32xf32, #tpu.memory_space<vmem>>, vector<16x32xf32>
    %c0_1 = arith.constant 0 : index
    %c0_2 = arith.constant 0 : index
    %1 = vector.load %arg1[%c0_1, %c0_2] : memref<32x128xf32, #tpu.memory_space<vmem>>, vector<32x128xf32>
    %c0_3 = arith.constant 0 : index
    %c0_4 = arith.constant 0 : index
    %2 = vector.load %arg2[%c0_3, %c0_4] : memref<1x128xf32, #tpu.memory_space<vmem>>, vector<1x128xf32>
    %3 = vector.extract_strided_slice %1 {offsets = [0, 0], sizes = [32, 96], strides = [1, 1]} : vector<32x128xf32> to vector<32x96xf32>
    %cst = arith.constant dense<0.000000e+00> : vector<16x96xf32>
    %4 = tpu.matmul %0, %3, %cst {dimension_numbers = #tpu.dot_dimension_numbers<[1], [0], [0], [1], [0, 0, 1, 1], [], []>} : vector<16x32xf32>, vector<32x96xf32>, vector<16x96xf32> -> vector<16x96xf32>
    %5 = vector.extract_strided_slice %2 {offsets = [0, 0], sizes = [1, 96], strides = [1, 1]} : vector<1x128xf32> to vector<1x96xf32>
    %6 = vector.broadcast %5 : vector<1x96xf32> to vector<16x96xf32>
    %7 = arith.addf %4, %6 : vector<16x96xf32>
    %8 = vector.extract_strided_slice %7 {offsets = [0, 0], sizes = [16, 24], strides = [1, 1]} : vector<16x96xf32> to vector<16x24xf32>
    %9 = vector.shape_cast %8 : vector<16x24xf32> to vector<2x8x24xf32>
    %10 = vector.extract_strided_slice %7 {offsets = [0, 24], sizes = [16, 24], strides = [1, 1]} : vector<16x96xf32> to vector<16x24xf32>
    %11 = vector.shape_cast %10 : vector<16x24xf32> to vector<2x8x24xf32>
    %12 = vector.extract_strided_slice %7 {offsets = [0, 48], sizes = [16, 24], strides = [1, 1]} : vector<16x96xf32> to vector<16x24xf32>
    %13 = vector.shape_cast %12 : vector<16x24xf32> to vector<2x8x24xf32>
    %14 = vector.extract_strided_slice %7 {offsets = [0, 72], sizes = [16, 24], strides = [1, 1]} : vector<16x96xf32> to vector<16x24xf32>
    %15 = vector.shape_cast %14 : vector<16x24xf32> to vector<2x8x24xf32>
    %16 = vector.shape_cast %9 : vector<2x8x24xf32> to vector<2x1x8x24xf32>
    %17 = vector.shape_cast %11 : vector<2x8x24xf32> to vector<2x1x8x24xf32>
    %18 = vector.shape_cast %13 : vector<2x8x24xf32> to vector<2x1x8x24xf32>
    %19 = vector.shape_cast %15 : vector<2x8x24xf32> to vector<2x1x8x24xf32>
    %20 = tpu.concatenate %16, %17, %18, %19 in 1 : vector<2x1x8x24xf32>, vector<2x1x8x24xf32>, vector<2x1x8x24xf32>, vector<2x1x8x24xf32> -> vector<2x4x8x24xf32>
    %21 = vector.shape_cast %20 : vector<2x4x8x24xf32> to vector<8x8x24xf32>
    %22 = vector.extract_strided_slice %21 {offsets = [0, 0, 0], sizes = [8, 8, 8], strides = [1, 1, 1]} : vector<8x8x24xf32> to vector<8x8x8xf32>
    %23 = vector.extract_strided_slice %21 {offsets = [0, 0, 8], sizes = [8, 8, 8], strides = [1, 1, 1]} : vector<8x8x24xf32> to vector<8x8x8xf32>
    %24 = vector.extract_strided_slice %21 {offsets = [0, 0, 16], sizes = [8, 8, 8], strides = [1, 1, 1]} : vector<8x8x24xf32> to vector<8x8x8xf32>
    "tpu.trace_start"() <{level = 10 : i32, message = "bqd,bkd->bqk"}> : () -> ()
    %cst_5 = arith.constant dense<0.000000e+00> : vector<8x8x8xf32>
    %25 = tpu.matmul %22, %23, %cst_5 {dimension_numbers = #tpu.dot_dimension_numbers<[2], [2], [1], [1], [0, 0, 0, 1, 1, 1], [0], [0]>} : vector<8x8x8xf32>, vector<8x8x8xf32>, vector<8x8x8xf32> -> vector<8x8x8xf32>
    "tpu.trace_stop"() : () -> ()
    %cst_6 = arith.constant 0.353553385 : f32
    %26 = vector.broadcast %cst_6 : f32 to vector<8x8x8xf32>
    %27 = arith.mulf %25, %26 : vector<8x8x8xf32>
    %cst_7 = arith.constant dense<0xFF800000> : vector<8x8xf32>
    %28 = vector.multi_reduction <maximumf>, %27, %cst_7 [2] : vector<8x8x8xf32> to vector<8x8xf32>
    %29 = vector.shape_cast %28 : vector<8x8xf32> to vector<8x8x1xf32>
    %30 = vector.broadcast %29 : vector<8x8x1xf32> to vector<8x8x8xf32>
    %31 = arith.subf %27, %30 : vector<8x8x8xf32>
    %32 = math.exp %31 : vector<8x8x8xf32>
    %cst_8 = arith.constant dense<0.000000e+00> : vector<8x8xf32>
    %33 = vector.multi_reduction <add>, %32, %cst_8 [2] : vector<8x8x8xf32> to vector<8x8xf32>
    %34 = vector.shape_cast %33 : vector<8x8xf32> to vector<8x8x1xf32>
    %35 = tpu.reciprocal %34 : vector<8x8x1xf32> -> vector<8x8x1xf32>
    %36 = vector.broadcast %35 : vector<8x8x1xf32> to vector<8x8x8xf32>
    %37 = arith.mulf %32, %36 : vector<8x8x8xf32>
    "tpu.trace_start"() <{level = 10 : i32, message = "bqk,bkd->bqd"}> : () -> ()
    %cst_9 = arith.constant dense<0.000000e+00> : vector<8x8x8xf32>
    %38 = tpu.matmul %37, %24, %cst_9 {dimension_numbers = #tpu.dot_dimension_numbers<[2], [1], [1], [2], [0, 0, 0, 1, 1, 2], [0], [0]>} : vector<8x8x8xf32>, vector<8x8x8xf32>, vector<8x8x8xf32> -> vector<8x8x8xf32>
    "tpu.trace_stop"() : () -> ()
    %39 = vector.shape_cast %37 : vector<8x8x8xf32> to vector<2x4x8x8xf32>
    %c0_10 = arith.constant 0 : index
    %c0_11 = arith.constant 0 : index
    %c0_12 = arith.constant 0 : index
    %c0_13 = arith.constant 0 : index
    %40 = vector.load %arg4[%c0_10, %c0_11, %c0_12, %c0_13] : memref<2x4x8x8xf32, #tpu.memory_space<vmem>>, vector<2x4x8x8xf32>
    tpu.vector_store %arg4[%c0_10, %c0_11, %c0_12, %c0_13], %39 {strides = array<i32>} : memref<2x4x8x8xf32, #tpu.memory_space<vmem>>, vector<2x4x8x8xf32>,
    %41 = vector.shape_cast %38 : vector<8x8x8xf32> to vector<2x4x8x8xf32>
    %42 = vector.extract_strided_slice %41 {offsets = [0, 0, 0, 0], sizes = [2, 1, 8, 8], strides = [1, 1, 1, 1]} : vector<2x4x8x8xf32> to vector<2x1x8x8xf32>
    %43 = vector.shape_cast %42 : vector<2x1x8x8xf32> to vector<2x8x8xf32>
    %44 = vector.extract_strided_slice %41 {offsets = [0, 1, 0, 0], sizes = [2, 1, 8, 8], strides = [1, 1, 1, 1]} : vector<2x4x8x8xf32> to vector<2x1x8x8xf32>
    %45 = vector.shape_cast %44 : vector<2x1x8x8xf32> to vector<2x8x8xf32>
    %46 = vector.extract_strided_slice %41 {offsets = [0, 2, 0, 0], sizes = [2, 1, 8, 8], strides = [1, 1, 1, 1]} : vector<2x4x8x8xf32> to vector<2x1x8x8xf32>
    %47 = vector.shape_cast %46 : vector<2x1x8x8xf32> to vector<2x8x8xf32>
    %48 = vector.extract_strided_slice %41 {offsets = [0, 3, 0, 0], sizes = [2, 1, 8, 8], strides = [1, 1, 1, 1]} : vector<2x4x8x8xf32> to vector<2x1x8x8xf32>
    %49 = vector.shape_cast %48 : vector<2x1x8x8xf32> to vector<2x8x8xf32>
    %50 = tpu.concatenate %43, %45, %47, %49 in 2 : vector<2x8x8xf32>, vector<2x8x8xf32>, vector<2x8x8xf32>, vector<2x8x8xf32> -> vector<2x8x32xf32>
    %51 = vector.shape_cast %50 : vector<2x8x32xf32> to vector<16x32xf32>
    %52 = vector.extract_strided_slice %1 {offsets = [0, 96], sizes = [32, 32], strides = [1, 1]} : vector<32x128xf32> to vector<32x32xf32>
    %cst_14 = arith.constant dense<0.000000e+00> : vector<16x32xf32>
    %53 = tpu.matmul %51, %52, %cst_14 {dimension_numbers = #tpu.dot_dimension_numbers<[1], [0], [0], [1], [0, 0, 1, 1], [], []>} : vector<16x32xf32>, vector<32x32xf32>, vector<16x32xf32> -> vector<16x32xf32>
    %54 = vector.extract_strided_slice %2 {offsets = [0, 96], sizes = [1, 32], strides = [1, 1]} : vector<1x128xf32> to vector<1x32xf32>
    %55 = vector.broadcast %54 : vector<1x32xf32> to vector<16x32xf32>
    %56 = arith.addf %53, %55 : vector<16x32xf32>
    %c0_15 = arith.constant 0 : index
    %c0_16 = arith.constant 0 : index
    %57 = vector.load %arg3[%c0_15, %c0_16] : memref<16x32xf32, #tpu.memory_space<vmem>>, vector<16x32xf32>
    tpu.vector_store %arg3[%c0_15, %c0_16], %56 {strides = array<i32>} : memref<16x32xf32, #tpu.memory_space<vmem>>, vector<16x32xf32>,
    return
  }
}

</mosaic_0001>

<llo_original>
// kernel: siglip_attention.1
$region0: #{siglip_attention.1}
  #allocation0 [shape = 'u32[]', space=smem, size = 0x4, offset = 0x4, fixed_abs, tag = 'smem constant byte address 0x4 - core index']
  #allocation1 [shape = 'u32[144,128]{1,0:T(1,128)}', space=vmem, size = 0x12000, scoped, tag = 'internal scratch']
  %s0 = inlined_call_operand.hbm [shape: f32[16,32], index: 0, kind: input, shape index: {}]
  %s1 = inlined_call_operand.hbm [shape: f32[32,128], index: 1, kind: input, shape index: {}]
  %s2 = inlined_call_operand.vmem [shape: f32[1,128], index: 2, kind: input, shape index: {}]
  %s3 = inlined_call_operand.hbm [shape: f32[16,32], index: 3, kind: output, shape index: {0}]
  %s4 = inlined_call_operand.hbm [shape: f32[2,4,8,8], index: 4, kind: output, shape index: {1}]
  %5 = xla_tuple %s3, %s4
  %s6 = sld [smem:[#allocation0]]
  $region38: #{siglip_attention.1} parent=0
    _
  %s8 = ssub.s32 1, %s6
  %s9 = scalar_select 0, %s8, %s6
  $region1: #{siglip_attention.1} parent=0
    #allocation2 [shape = 'u8[8192]{0}', space=vmem, size = 0x2000, scoped, tag = 'input window, operand 0, single buffered']
    #allocation3 [shape = 's32[1]{0}', space=sflag, size = 0x4, scoped, tag = 'scoped memory for siglip_attention.1']
    #allocation4 [shape = 's32[1]{0}', space=sflag, size = 0x4, scoped, tag = 'scoped memory for siglip_attention.1']
    #allocation5 [shape = 'u8[16384]{0}', space=vmem, size = 0x4000, scoped, tag = 'input window, operand 1, single buffered']
    #allocation6 [shape = 's32[1]{0}', space=sflag, size = 0x4, scoped, tag = 'scoped memory for siglip_attention.1']
    #allocation7 [shape = 'u8[8192]{0}', space=vmem, size = 0x2000, scoped, tag = 'output window, operand 0, single buffered']
    #allocation8 [shape = 'u8[32768]{0}', space=vmem, size = 0x8000, scoped, tag = 'output window, operand 1, single buffered']
    #allocation9 [shape = 's32[1]{0}', space=sflag, size = 0x4, scoped, tag = 'scoped memory for siglip_attention.1']
    %10 = vsyncpa [#allocation3], 0
    %11 = vsyncpa [#allocation6], 0
    %12 = vsyncpa [#allocation4], 0
    %13 = vsyncpa [#allocation9], 0
    // Predicated region
    $region2: #{siglip_attention.1} parent=1 // pred_check
      _
    $region3: #{siglip_attention.1} parent=1 // pred_check_branch
      %15 = sbr.rel (0) target = $region5
    $region4: #{siglip_attention.1} parent=1 // pred_region
      %s17 = ssub.s32 256, 256
      %18 = vsyncadd [#allocation3], %s17
      %s19 = sshll.u32 [#allocation2], 4
      %s20 = int_to_ptr.vmem [resolvable:$true] %s19
      %25 = dma.hbm_to_vmem [thread:$0]  %s0, 256, %s20, [#allocation3], 128, 128, 8
    $region5: #{siglip_attention.1} parent=1 // pred_fallthru
      _
    // Predicated region
    $region6: #{siglip_attention.1} parent=1 // pred_check
      _
    $region7: #{siglip_attention.1} parent=1 // pred_check_branch
      %27 = sbr.rel (0) target = $region9
    $region8: #{siglip_attention.1} parent=1 // pred_region
      %s29 = ssub.s32 512, 512
      %30 = vsyncadd [#allocation6], %s29
      %s31 = sshll.u32 [#allocation5], 4
      %s32 = int_to_ptr.vmem [resolvable:$true] %s31
      %37 = dma.hbm_to_vmem [thread:$0]  %s1, 512, %s32, [#allocation6], 128, 128, 8
    $region9: #{siglip_attention.1} parent=1 // pred_fallthru
      _
    // Predicated region
    $region10: #{siglip_attention.1} parent=1 // pred_check
      _
    $region11: #{siglip_attention.1} parent=1 // pred_check_branch
      %39 = sbr.rel (0) target = $region13
    $region12: #{siglip_attention.1} parent=1 // pred_region
      _
    $region13: #{siglip_attention.1} parent=1 // pred_fallthru
      _
    // Predicated region
    $region14: #{siglip_attention.1} parent=1 // pred_check
      _
    $region15: #{siglip_attention.1} parent=1 // pred_check_branch
      %41 = sbr.rel (0) target = $region17
    $region16: #{siglip_attention.1} parent=1 // pred_region
      %42 = dma.done [#allocation3], 256
    $region17: #{siglip_attention.1} parent=1 // pred_fallthru
      _
    // Predicated region
    $region18: #{siglip_attention.1} parent=1 // pred_check
      _
    $region19: #{siglip_attention.1} parent=1 // pred_check_branch
      %44 = sbr.rel (0) target = $region21
    $region20: #{siglip_attention.1} parent=1 // pred_region
      %45 = dma.done [#allocation6], 512
    $region21: #{siglip_attention.1} parent=1 // pred_fallthru
      _
    %v46 = vld [vmem:[#allocation2] sm:$0xff]
    %v47 = vld [vmem:[#allocation2 + $0x8] sm:$0xff]
    %v48 = vld [vmem:[#allocation5] sm:$0xff]
    %v49 = vld [vmem:[#allocation5 + $0x8] sm:$0xff]
    %v50 = vld [vmem:[#allocation5 + $0x10] sm:$0xff]
    %v51 = vld [vmem:[#allocation5 + $0x18] sm:$0xff]
    %v52 = vld [vmem:[%s2] sm:$0x1]
    %v54 = vlaneseq
    %v55 = vshrl.u32 %v54, 7
    %v56 = vsub.s32 0, %v55
    %v57 = vrot.slane %v52, %v56
    %vm59 = vcmask 261120
    %v61 = vsel %vm59, %v46, 0
    %v64 = vsel %vm59, %v47, 0
    %66 = vmatprep.subr.mxu0 0.0
    %67 = vmatpush1.msra.mxu0 %v48
    %68 = vmatprep.subr.mxu0 0.0
    %69 = vmatpush1.msra.mxu0 %v49
    %70 = vmatprep.subr.mxu0 0.0
    %71 = vmatpush1.msra.mxu0 %v50
    %72 = vmatprep.subr.mxu0 0.0
    %73 = vmatpush1.msra.mxu0 %v51
    %74 = vmatprep.subr.mxu0 0.0
    %75 = vmatpush1.msra.mxu0 0.0
    %76 = vmatprep.subr.mxu0 0.0
    %77 = vmatpush1.msra.mxu0 0.0
    %78 = vmatprep.subr.mxu0 0.0
    %79 = vmatpush1.msra.mxu0 0.0
    %80 = vmatprep.subr.mxu0 0.0
    %81 = vmatpush1.msra.mxu0 0.0
    %82 = vmatprep.subr.mxu0 0.0
    %83 = vmatpush1.msra.mxu0 0.0
    %84 = vmatprep.subr.mxu0 0.0
    %85 = vmatpush1.msra.mxu0 0.0
    %86 = vmatprep.subr.mxu0 0.0
    %87 = vmatpush1.msra.mxu0 0.0
    %88 = vmatprep.subr.mxu0 0.0
    %89 = vmatpush1.msra.mxu0 0.0
    %90 = vmatprep.subr.mxu0 0.0
    %91 = vmatpush1.msra.mxu0 0.0
    %92 = vmatprep.subr.mxu0 0.0
    %93 = vmatpush1.msra.mxu0 0.0
    %94 = vmatprep.subr.mxu0 0.0
    %95 = vmatpush1.msra.mxu0 0.0
    %96 = vmatprep.subr.mxu0 0.0
    %97 = vmatpush1.msra.mxu0 0.0
    %98 = vmatprep.subr.mxu0 0.0
    %99 = vmatpush1.msra.mxu0 0.0
    %100 = vmatprep.subr.mxu0 0.0
    %101 = vmatpush1.msra.mxu0 0.0
    %102 = vmatprep.subr.mxu0 0.0
    %103 = vmatpush1.msra.mxu0 0.0
    %104 = vmatprep.subr.mxu0 0.0
    %105 = vmatpush1.msra.mxu0 0.0
    %106 = vmatprep.subr.mxu0 0.0
    %107 = vmatpush1.msra.mxu0 0.0
    %108 = vmatprep.subr.mxu0 0.0
    %109 = vmatpush1.msra.mxu0 0.0
    %110 = vmatprep.subr.mxu0 0.0
    %111 = vmatpush1.msra.mxu0 0.0
    %112 = vmatprep.subr.mxu0 0.0
    %113 = vmatpush1.msra.mxu0 0.0
    %114 = vmatprep.subr.mxu0 0.0
    %115 = vmatpush1.msra.mxu0 0.0
    %116 = vmatprep.subr.mxu0 0.0
    %117 = vmatpush1.msra.mxu0 0.0
    %118 = vmatprep.subr.mxu0 0.0
    %119 = vmatpush1.msra.mxu0 0.0
    %120 = vmatprep.subr.mxu0 0.0
    %121 = vmatpush1.msra.mxu0 0.0
    %122 = vmatprep.subr.mxu0 0.0
    %123 = vmatpush1.msra.mxu0 0.0
    %124 = vmatprep.subr.mxu0 0.0
    %125 = vmatpush1.msra.mxu0 0.0
    %126 = vmatprep.subr.mxu0 0.0
    %127 = vmatpush1.msra.mxu0 0.0
    %128 = vmatprep.subr.mxu0 0.0
    %129 = vmatpush1.msra.mxu0 0.0
    %130 = vmatprep.mubr.f32.mxu0 0.0
    %131 = vmatmul.mubr.f32.gmra.mrb[0].mxu0 %v61
    %v132 = vpop.f32.mrb[0].mxu0
    %v133 = vadd.f32 %v57, %v132
    %v134 = vpop.f32.mrb[0].mxu0
    %135 = vmatprep.mubr.f32.mxu0 0.0
    %136 = vmatmul.mubr.f32.gmra.mrb[0].mxu0 %v64
    %v137 = vpop.f32.mrb[0].mxu0
    %v138 = vadd.f32 %v57, %v137
    %v139 = vpop.f32.mrb[0].mxu0
    %140 = vdwg.mxu0
    %143 = vrot.lane.b32.xlu0 %v133, 104
    %v144 = vpop.permute.xlu0 %143
    %145 = vrot.lane.b32.xlu0 %v138, 104
    %v146 = vpop.permute.xlu0 %145
    %147 = vrot.lane.b32.xlu0 %v133, 80
    %v148 = vpop.permute.xlu0 %147
    %149 = vrot.lane.b32.xlu0 %v138, 80
    %v150 = vpop.permute.xlu0 %149
    %151 = vrot.lane.b32.xlu0 %v133, 56
    %v152 = vpop.permute.xlu0 %151
    %153 = vrot.lane.b32.xlu0 %v138, 56
    %v154 = vpop.permute.xlu0 %153
    %155 = vrot.lane.b32.xlu0 %v133, 120
    %v156 = vpop.permute.xlu0 %155
    %vm157 = vcmask 64512
    %v158 = vsel %vm157, %v133, 0
    %v160 = vsel %vm157, %v156, 0
    %162 = vmatprep.subr.mxu0 0.0
    %163 = vmatpush1.xpose.msra.mxu0 %v160
    %164 = vmatprep.subr.mxu0 0.0
    %165 = vmatpush1.xpose.msra.mxu0 0.0
    %166 = vmatprep.subr.mxu0 0.0
    %167 = vmatpush1.xpose.msra.mxu0 0.0
    %168 = vmatprep.subr.mxu0 0.0
    %169 = vmatpush1.xpose.msra.mxu0 0.0
    %170 = vmatprep.subr.mxu0 0.0
    %171 = vmatpush1.xpose.msra.mxu0 0.0
    %172 = vmatprep.subr.mxu0 0.0
    %173 = vmatpush1.xpose.msra.mxu0 0.0
    %174 = vmatprep.subr.mxu0 0.0
    %175 = vmatpush1.xpose.msra.mxu0 0.0
    %176 = vmatprep.subr.mxu0 0.0
    %177 = vmatpush1.xpose.msra.mxu0 0.0
    %178 = vmatprep.subr.mxu0 0.0
    %179 = vmatpush1.xpose.msra.mxu0 0.0
    %180 = vmatprep.subr.mxu0 0.0
    %181 = vmatpush1.xpose.msra.mxu0 0.0
    %182 = vmatprep.subr.mxu0 0.0
    %183 = vmatpush1.xpose.msra.mxu0 0.0
    %184 = vmatprep.subr.mxu0 0.0
    %185 = vmatpush1.xpose.msra.mxu0 0.0
    %186 = vmatprep.subr.mxu0 0.0
    %187 = vmatpush1.xpose.msra.mxu0 0.0
    %188 = vmatprep.subr.mxu0 0.0
    %189 = vmatpush1.xpose.msra.mxu0 0.0
    %190 = vmatprep.subr.mxu0 0.0
    %191 = vmatpush1.xpose.msra.mxu0 0.0
    %192 = vmatprep.subr.mxu0 0.0
    %193 = vmatpush1.xpose.msra.mxu0 0.0
    %194 = vmatprep.subr.mxu0 0.0
    %195 = vmatpush1.xpose.msra.mxu0 0.0
    %196 = vmatprep.subr.mxu0 0.0
    %197 = vmatpush1.xpose.msra.mxu0 0.0
    %198 = vmatprep.subr.mxu0 0.0
    %199 = vmatpush1.xpose.msra.mxu0 0.0
    %200 = vmatprep.subr.mxu0 0.0
    %201 = vmatpush1.xpose.msra.mxu0 0.0
    %202 = vmatprep.subr.mxu0 0.0
    %203 = vmatpush1.xpose.msra.mxu0 0.0
    %204 = vmatprep.subr.mxu0 0.0
    %205 = vmatpush1.xpose.msra.mxu0 0.0
    %206 = vmatprep.subr.mxu0 0.0
    %207 = vmatpush1.xpose.msra.mxu0 0.0
    %208 = vmatprep.subr.mxu0 0.0
    %209 = vmatpush1.xpose.msra.mxu0 0.0
    %210 = vmatprep.subr.mxu0 0.0
    %211 = vmatpush1.xpose.msra.mxu0 0.0
    %212 = vmatprep.subr.mxu0 0.0
    %213 = vmatpush1.xpose.msra.mxu0 0.0
    %214 = vmatprep.subr.mxu0 0.0
    %215 = vmatpush1.xpose.msra.mxu0 0.0
    %216 = vmatprep.subr.mxu0 0.0
    %217 = vmatpush1.xpose.msra.mxu0 0.0
    %218 = vmatprep.subr.mxu0 0.0
    %219 = vmatpush1.xpose.msra.mxu0 0.0
    %220 = vmatprep.subr.mxu0 0.0
    %221 = vmatpush1.xpose.msra.mxu0 0.0
    %222 = vmatprep.subr.mxu0 0.0
    %223 = vmatpush1.xpose.msra.mxu0 0.0
    %224 = vmatprep.subr.mxu0 0.0
    %225 = vmatpush1.xpose.msra.mxu0 0.0
    %226 = vmatprep.mubr.f32.mxu0 0.0
    %227 = vmatmul.mubr.f32.gmra.mrb[0].mxu0 %v158
    %v228 = vpop.f32.mrb[0].mxu0
    %v229 = vadd.f32 0.0, %v228
    %v230 = vpop.f32.mrb[0].mxu0
    %231 = vdwg.mxu0
    %232 = vrot.lane.b32.xlu0 %v144, 120
    %v233 = vpop.permute.xlu0 %232
    %v234 = vsel %vm157, %v144, 0
    %v236 = vsel %vm157, %v233, 0
    %238 = vmatprep.subr.mxu0 0.0
    %239 = vmatpush1.xpose.msra.mxu0 %v236
    %240 = vmatprep.subr.mxu0 0.0
    %241 = vmatpush1.xpose.msra.mxu0 0.0
    %242 = vmatprep.subr.mxu0 0.0
    %243 = vmatpush1.xpose.msra.mxu0 0.0
    %244 = vmatprep.subr.mxu0 0.0
    %245 = vmatpush1.xpose.msra.mxu0 0.0
    %246 = vmatprep.subr.mxu0 0.0
    %247 = vmatpush1.xpose.msra.mxu0 0.0
    %248 = vmatprep.subr.mxu0 0.0
    %249 = vmatpush1.xpose.msra.mxu0 0.0
    %250 = vmatprep.subr.mxu0 0.0
    %251 = vmatpush1.xpose.msra.mxu0 0.0
    %252 = vmatprep.subr.mxu0 0.0
    %253 = vmatpush1.xpose.msra.mxu0 0.0
    %254 = vmatprep.subr.mxu0 0.0
    %255 = vmatpush1.xpose.msra.mxu0 0.0
    %256 = vmatprep.subr.mxu0 0.0
    %257 = vmatpush1.xpose.msra.mxu0 0.0
    %258 = vmatprep.subr.mxu0 0.0
    %259 = vmatpush1.xpose.msra.mxu0 0.0
    %260 = vmatprep.subr.mxu0 0.0
    %261 = vmatpush1.xpose.msra.mxu0 0.0
    %262 = vmatprep.subr.mxu0 0.0
    %263 = vmatpush1.xpose.msra.mxu0 0.0
    %264 = vmatprep.subr.mxu0 0.0
    %265 = vmatpush1.xpose.msra.mxu0 0.0
    %266 = vmatprep.subr.mxu0 0.0
    %267 = vmatpush1.xpose.msra.mxu0 0.0
    %268 = vmatprep.subr.mxu0 0.0
    %269 = vmatpush1.xpose.msra.mxu0 0.0
    %270 = vmatprep.subr.mxu0 0.0
    %271 = vmatpush1.xpose.msra.mxu0 0.0
    %272 = vmatprep.subr.mxu0 0.0
    %273 = vmatpush1.xpose.msra.mxu0 0.0
    %274 = vmatprep.subr.mxu0 0.0
    %275 = vmatpush1.xpose.msra.mxu0 0.0
    %276 = vmatprep.subr.mxu0 0.0
    %277 = vmatpush1.xpose.msra.mxu0 0.0
    %278 = vmatprep.subr.mxu0 0.0
    %279 = vmatpush1.xpose.msra.mxu0 0.0
    %280 = vmatprep.subr.mxu0 0.0
    %281 = vmatpush1.xpose.msra.mxu0 0.0
    %282 = vmatprep.subr.mxu0 0.0
    %283 = vmatpush1.xpose.msra.mxu0 0.0
    %284 = vmatprep.subr.mxu0 0.0
    %285 = vmatpush1.xpose.msra.mxu0 0.0
    %286 = vmatprep.subr.mxu0 0.0
    %287 = vmatpush1.xpose.msra.mxu0 0.0
    %288 = vmatprep.subr.mxu0 0.0
    %289 = vmatpush1.xpose.msra.mxu0 0.0
    %290 = vmatprep.subr.mxu0 0.0
    %291 = vmatpush1.xpose.msra.mxu0 0.0
    %292 = vmatprep.subr.mxu0 0.0
    %293 = vmatpush1.xpose.msra.mxu0 0.0
    %294 = vmatprep.subr.mxu0 0.0
    %295 = vmatpush1.xpose.msra.mxu0 0.0
    %296 = vmatprep.subr.mxu0 0.0
    %297 = vmatpush1.xpose.msra.mxu0 0.0
    %298 = vmatprep.subr.mxu0 0.0
    %299 = vmatpush1.xpose.msra.mxu0 0.0
    %300 = vmatprep.subr.mxu0 0.0
    %301 = vmatpush1.xpose.msra.mxu0 0.0
    %302 = vmatprep.mubr.f32.mxu0 0.0
    %303 = vmatmul.mubr.f32.gmra.mrb[0].mxu0 %v234
    %v304 = vpop.f32.mrb[0].mxu0
    %v305 = vadd.f32 0.0, %v304
    %v306 = vpop.f32.mrb[0].mxu0
    %307 = vdwg.mxu0
    %308 = vrot.lane.b32.xlu0 %v148, 120
    %v309 = vpop.permute.xlu0 %308
    %v310 = vsel %vm157, %v148, 0
    %v312 = vsel %vm157, %v309, 0
    %314 = vmatprep.subr.mxu0 0.0
    %315 = vmatpush1.xpose.msra.mxu0 %v312
    %316 = vmatprep.subr.mxu0 0.0
    %317 = vmatpush1.xpose.msra.mxu0 0.0
    %318 = vmatprep.subr.mxu0 0.0
    %319 = vmatpush1.xpose.msra.mxu0 0.0
    %320 = vmatprep.subr.mxu0 0.0
    %321 = vmatpush1.xpose.msra.mxu0 0.0
    %322 = vmatprep.subr.mxu0 0.0
    %323 = vmatpush1.xpose.msra.mxu0 0.0
    %324 = vmatprep.subr.mxu0 0.0
    %325 = vmatpush1.xpose.msra.mxu0 0.0
    %326 = vmatprep.subr.mxu0 0.0
    %327 = vmatpush1.xpose.msra.mxu0 0.0
    %328 = vmatprep.subr.mxu0 0.0
    %329 = vmatpush1.xpose.msra.mxu0 0.0
    %330 = vmatprep.subr.mxu0 0.0
    %331 = vmatpush1.xpose.msra.mxu0 0.0
    %332 = vmatprep.subr.mxu0 0.0
    %333 = vmatpush1.xpose.msra.mxu0 0.0
    %334 = vmatprep.subr.mxu0 0.0
    %335 = vmatpush1.xpose.msra.mxu0 0.0
    %336 = vmatprep.subr.mxu0 0.0
    %337 = vmatpush1.xpose.msra.mxu0 0.0
    %338 = vmatprep.subr.mxu0 0.0
    %339 = vmatpush1.xpose.msra.mxu0 0.0
    %340 = vmatprep.subr.mxu0 0.0
    %341 = vmatpush1.xpose.msra.mxu0 0.0
    %342 = vmatprep.subr.mxu0 0.0
    %343 = vmatpush1.xpose.msra.mxu0 0.0
    %344 = vmatprep.subr.mxu0 0.0
    %345 = vmatpush1.xpose.msra.mxu0 0.0
    %346 = vmatprep.subr.mxu0 0.0
    %347 = vmatpush1.xpose.msra.mxu0 0.0
    %348 = vmatprep.subr.mxu0 0.0
    %349 = vmatpush1.xpose.msra.mxu0 0.0
    %350 = vmatprep.subr.mxu0 0.0
    %351 = vmatpush1.xpose.msra.mxu0 0.0
    %352 = vmatprep.subr.mxu0 0.0
    %353 = vmatpush1.xpose.msra.mxu0 0.0
    %354 = vmatprep.subr.mxu0 0.0
    %355 = vmatpush1.xpose.msra.mxu0 0.0
    %356 = vmatprep.subr.mxu0 0.0
    %357 = vmatpush1.xpose.msra.mxu0 0.0
    %358 = vmatprep.subr.mxu0 0.0
    %359 = vmatpush1.xpose.msra.mxu0 0.0
    %360 = vmatprep.subr.mxu0 0.0
    %361 = vmatpush1.xpose.msra.mxu0 0.0
    %362 = vmatprep.subr.mxu0 0.0
    %363 = vmatpush1.xpose.msra.mxu0 0.0
    %364 = vmatprep.subr.mxu0 0.0
    %365 = vmatpush1.xpose.msra.mxu0 0.0
    %366 = vmatprep.subr.mxu0 0.0
    %367 = vmatpush1.xpose.msra.mxu0 0.0
    %368 = vmatprep.subr.mxu0 0.0
    %369 = vmatpush1.xpose.msra.mxu0 0.0
    %370 = vmatprep.subr.mxu0 0.0
    %371 = vmatpush1.xpose.msra.mxu0 0.0
    %372 = vmatprep.subr.mxu0 0.0
    %373 = vmatpush1.xpose.msra.mxu0 0.0
    %374 = vmatprep.subr.mxu0 0.0
    %375 = vmatpush1.xpose.msra.mxu0 0.0
    %376 = vmatprep.subr.mxu0 0.0
    %377 = vmatpush1.xpose.msra.mxu0 0.0
    %378 = vmatprep.mubr.f32.mxu0 0.0
    %379 = vmatmul.mubr.f32.gmra.mrb[0].mxu0 %v310
    %v380 = vpop.f32.mrb[0].mxu0
    %v381 = vadd.f32 0.0, %v380
    %v382 = vpop.f32.mrb[0].mxu0
    %383 = vdwg.mxu0
    %384 = vrot.lane.b32.xlu0 %v152, 120
    %v385 = vpop.permute.xlu0 %384
    %v386 = vsel %vm157, %v152, 0
    %v388 = vsel %vm157, %v385, 0
    %390 = vmatprep.subr.mxu0 0.0
    %391 = vmatpush1.xpose.msra.mxu0 %v388
    %392 = vmatprep.subr.mxu0 0.0
    %393 = vmatpush1.xpose.msra.mxu0 0.0
    %394 = vmatprep.subr.mxu0 0.0
    %395 = vmatpush1.xpose.msra.mxu0 0.0
    %396 = vmatprep.subr.mxu0 0.0
    %397 = vmatpush1.xpose.msra.mxu0 0.0
    %398 = vmatprep.subr.mxu0 0.0
    %399 = vmatpush1.xpose.msra.mxu0 0.0
    %400 = vmatprep.subr.mxu0 0.0
    %401 = vmatpush1.xpose.msra.mxu0 0.0
    %402 = vmatprep.subr.mxu0 0.0
    %403 = vmatpush1.xpose.msra.mxu0 0.0
    %404 = vmatprep.subr.mxu0 0.0
    %405 = vmatpush1.xpose.msra.mxu0 0.0
    %406 = vmatprep.subr.mxu0 0.0
    %407 = vmatpush1.xpose.msra.mxu0 0.0
    %408 = vmatprep.subr.mxu0 0.0
    %409 = vmatpush1.xpose.msra.mxu0 0.0
    %410 = vmatprep.subr.mxu0 0.0
    %411 = vmatpush1.xpose.msra.mxu0 0.0
    %412 = vmatprep.subr.mxu0 0.0
    %413 = vmatpush1.xpose.msra.mxu0 0.0
    %414 = vmatprep.subr.mxu0 0.0
    %415 = vmatpush1.xpose.msra.mxu0 0.0
    %416 = vmatprep.subr.mxu0 0.0
    %417 = vmatpush1.xpose.msra.mxu0 0.0
    %418 = vmatprep.subr.mxu0 0.0
    %419 = vmatpush1.xpose.msra.mxu0 0.0
    %420 = vmatprep.subr.mxu0 0.0
    %421 = vmatpush1.xpose.msra.mxu0 0.0
    %422 = vmatprep.subr.mxu0 0.0
    %423 = vmatpush1.xpose.msra.mxu0 0.0
    %424 = vmatprep.subr.mxu0 0.0
    %425 = vmatpush1.xpose.msra.mxu0 0.0
    %426 = vmatprep.subr.mxu0 0.0
    %427 = vmatpush1.xpose.msra.mxu0 0.0
    %428 = vmatprep.subr.mxu0 0.0
    %429 = vmatpush1.xpose.msra.mxu0 0.0
    %430 = vmatprep.subr.mxu0 0.0
    %431 = vmatpush1.xpose.msra.mxu0 0.0
    %432 = vmatprep.subr.mxu0 0.0
    %433 = vmatpush1.xpose.msra.mxu0 0.0
    %434 = vmatprep.subr.mxu0 0.0
    %435 = vmatpush1.xpose.msra.mxu0 0.0
    %436 = vmatprep.subr.mxu0 0.0
    %437 = vmatpush1.xpose.msra.mxu0 0.0
    %438 = vmatprep.subr.mxu0 0.0
    %439 = vmatpush1.xpose.msra.mxu0 0.0
    %440 = vmatprep.subr.mxu0 0.0
    %441 = vmatpush1.xpose.msra.mxu0 0.0
    %442 = vmatprep.subr.mxu0 0.0
    %443 = vmatpush1.xpose.msra.mxu0 0.0
    %444 = vmatprep.subr.mxu0 0.0
    %445 = vmatpush1.xpose.msra.mxu0 0.0
    %446 = vmatprep.subr.mxu0 0.0
    %447 = vmatpush1.xpose.msra.mxu0 0.0
    %448 = vmatprep.subr.mxu0 0.0
    %449 = vmatpush1.xpose.msra.mxu0 0.0
    %450 = vmatprep.subr.mxu0 0.0
    %451 = vmatpush1.xpose.msra.mxu0 0.0
    %452 = vmatprep.subr.mxu0 0.0
    %453 = vmatpush1.xpose.msra.mxu0 0.0
    %454 = vmatprep.mubr.f32.mxu0 0.0
    %455 = vmatmul.mubr.f32.gmra.mrb[0].mxu0 %v386
    %v456 = vpop.f32.mrb[0].mxu0
    %v457 = vadd.f32 0.0, %v456
    %v458 = vpop.f32.mrb[0].mxu0
    %459 = vdwg.mxu0
    %460 = vrot.lane.b32.xlu0 %v138, 120
    %v461 = vpop.permute.xlu0 %460
    %v462 = vsel %vm157, %v138, 0
    %v464 = vsel %vm157, %v461, 0
    %466 = vmatprep.subr.mxu0 0.0
    %467 = vmatpush1.xpose.msra.mxu0 %v464
    %468 = vmatprep.subr.mxu0 0.0
    %469 = vmatpush1.xpose.msra.mxu0 0.0
    %470 = vmatprep.subr.mxu0 0.0
    %471 = vmatpush1.xpose.msra.mxu0 0.0
    %472 = vmatprep.subr.mxu0 0.0
    %473 = vmatpush1.xpose.msra.mxu0 0.0
    %474 = vmatprep.subr.mxu0 0.0
    %475 = vmatpush1.xpose.msra.mxu0 0.0
    %476 = vmatprep.subr.mxu0 0.0
    %477 = vmatpush1.xpose.msra.mxu0 0.0
    %478 = vmatprep.subr.mxu0 0.0
    %479 = vmatpush1.xpose.msra.mxu0 0.0
    %480 = vmatprep.subr.mxu0 0.0
    %481 = vmatpush1.xpose.msra.mxu0 0.0
    %482 = vmatprep.subr.mxu0 0.0
    %483 = vmatpush1.xpose.msra.mxu0 0.0
    %484 = vmatprep.subr.mxu0 0.0
    %485 = vmatpush1.xpose.msra.mxu0 0.0
    %486 = vmatprep.subr.mxu0 0.0
    %487 = vmatpush1.xpose.msra.mxu0 0.0
    %488 = vmatprep.subr.mxu0 0.0
    %489 = vmatpush1.xpose.msra.mxu0 0.0
    %490 = vmatprep.subr.mxu0 0.0
    %491 = vmatpush1.xpose.msra.mxu0 0.0
    %492 = vmatprep.subr.mxu0 0.0
    %493 = vmatpush1.xpose.msra.mxu0 0.0
    %494 = vmatprep.subr.mxu0 0.0
    %495 = vmatpush1.xpose.msra.mxu0 0.0
    %496 = vmatprep.subr.mxu0 0.0
    %497 = vmatpush1.xpose.msra.mxu0 0.0
    %498 = vmatprep.subr.mxu0 0.0
    %499 = vmatpush1.xpose.msra.mxu0 0.0
    %500 = vmatprep.subr.mxu0 0.0
    %501 = vmatpush1.xpose.msra.mxu0 0.0
    %502 = vmatprep.subr.mxu0 0.0
    %503 = vmatpush1.xpose.msra.mxu0 0.0
    %504 = vmatprep.subr.mxu0 0.0
    %505 = vmatpush1.xpose.msra.mxu0 0.0
    %506 = vmatprep.subr.mxu0 0.0
    %507 = vmatpush1.xpose.msra.mxu0 0.0
    %508 = vmatprep.subr.mxu0 0.0
    %509 = vmatpush1.xpose.msra.mxu0 0.0
    %510 = vmatprep.subr.mxu0 0.0
    %511 = vmatpush1.xpose.msra.mxu0 0.0
    %512 = vmatprep.subr.mxu0 0.0
    %513 = vmatpush1.xpose.msra.mxu0 0.0
    %514 = vmatprep.subr.mxu0 0.0
    %515 = vmatpush1.xpose.msra.mxu0 0.0
    %516 = vmatprep.subr.mxu0 0.0
    %517 = vmatpush1.xpose.msra.mxu0 0.0
    %518 = vmatprep.subr.mxu0 0.0
    %519 = vmatpush1.xpose.msra.mxu0 0.0
    %520 = vmatprep.subr.mxu0 0.0
    %521 = vmatpush1.xpose.msra.mxu0 0.0
    %522 = vmatprep.subr.mxu0 0.0
    %523 = vmatpush1.xpose.msra.mxu0 0.0
    %524 = vmatprep.subr.mxu0 0.0
    %525 = vmatpush1.xpose.msra.mxu0 0.0
    %526 = vmatprep.subr.mxu0 0.0
    %527 = vmatpush1.xpose.msra.mxu0 0.0
    %528 = vmatprep.subr.mxu0 0.0
    %529 = vmatpush1.xpose.msra.mxu0 0.0
    %530 = vmatprep.mubr.f32.mxu0 0.0
    %531 = vmatmul.mubr.f32.gmra.mrb[0].mxu0 %v462
    %v532 = vpop.f32.mrb[0].mxu0
    %v533 = vadd.f32 0.0, %v532
    %v534 = vpop.f32.mrb[0].mxu0
    %535 = vdwg.mxu0
    %536 = vrot.lane.b32.xlu0 %v146, 120
    %v537 = vpop.permute.xlu0 %536
    %v538 = vsel %vm157, %v146, 0
    %v540 = vsel %vm157, %v537, 0
    %542 = vmatprep.subr.mxu0 0.0
    %543 = vmatpush1.xpose.msra.mxu0 %v540
    %544 = vmatprep.subr.mxu0 0.0
    %545 = vmatpush1.xpose.msra.mxu0 0.0
    %546 = vmatprep.subr.mxu0 0.0
    %547 = vmatpush1.xpose.msra.mxu0 0.0
    %548 = vmatprep.subr.mxu0 0.0
    %549 = vmatpush1.xpose.msra.mxu0 0.0
    %550 = vmatprep.subr.mxu0 0.0
    %551 = vmatpush1.xpose.msra.mxu0 0.0
    %552 = vmatprep.subr.mxu0 0.0
    %553 = vmatpush1.xpose.msra.mxu0 0.0
    %554 = vmatprep.subr.mxu0 0.0
    %555 = vmatpush1.xpose.msra.mxu0 0.0
    %556 = vmatprep.subr.mxu0 0.0
    %557 = vmatpush1.xpose.msra.mxu0 0.0
    %558 = vmatprep.subr.mxu0 0.0
    %559 = vmatpush1.xpose.msra.mxu0 0.0
    %560 = vmatprep.subr.mxu0 0.0
    %561 = vmatpush1.xpose.msra.mxu0 0.0
    %562 = vmatprep.subr.mxu0 0.0
    %563 = vmatpush1.xpose.msra.mxu0 0.0
    %564 = vmatprep.subr.mxu0 0.0
    %565 = vmatpush1.xpose.msra.mxu0 0.0
    %566 = vmatprep.subr.mxu0 0.0
    %567 = vmatpush1.xpose.msra.mxu0 0.0
    %568 = vmatprep.subr.mxu0 0.0
    %569 = vmatpush1.xpose.msra.mxu0 0.0
    %570 = vmatprep.subr.mxu0 0.0
    %571 = vmatpush1.xpose.msra.mxu0 0.0
    %572 = vmatprep.subr.mxu0 0.0
    %573 = vmatpush1.xpose.msra.mxu0 0.0
    %574 = vmatprep.subr.mxu0 0.0
    %575 = vmatpush1.xpose.msra.mxu0 0.0
    %576 = vmatprep.subr.mxu0 0.0
    %577 = vmatpush1.xpose.msra.mxu0 0.0
    %578 = vmatprep.subr.mxu0 0.0
    %579 = vmatpush1.xpose.msra.mxu0 0.0
    %580 = vmatprep.subr.mxu0 0.0
    %581 = vmatpush1.xpose.msra.mxu0 0.0
    %582 = vmatprep.subr.mxu0 0.0
    %583 = vmatpush1.xpose.msra.mxu0 0.0
    %584 = vmatprep.subr.mxu0 0.0
    %585 = vmatpush1.xpose.msra.mxu0 0.0
    %586 = vmatprep.subr.mxu0 0.0
    %587 = vmatpush1.xpose.msra.mxu0 0.0
    %588 = vmatprep.subr.mxu0 0.0
    %589 = vmatpush1.xpose.msra.mxu0 0.0
    %590 = vmatprep.subr.mxu0 0.0
    %591 = vmatpush1.xpose.msra.mxu0 0.0
    %592 = vmatprep.subr.mxu0 0.0
    %593 = vmatpush1.xpose.msra.mxu0 0.0
    %594 = vmatprep.subr.mxu0 0.0
    %595 = vmatpush1.xpose.msra.mxu0 0.0
    %596 = vmatprep.subr.mxu0 0.0
    %597 = vmatpush1.xpose.msra.mxu0 0.0
    %598 = vmatprep.subr.mxu0 0.0
    %599 = vmatpush1.xpose.msra.mxu0 0.0
    %600 = vmatprep.subr.mxu0 0.0
    %601 = vmatpush1.xpose.msra.mxu0 0.0
    %602 = vmatprep.subr.mxu0 0.0
    %603 = vmatpush1.xpose.msra.mxu0 0.0
    %604 = vmatprep.subr.mxu0 0.0
    %605 = vmatpush1.xpose.msra.mxu0 0.0
    %606 = vmatprep.mubr.f32.mxu0 0.0
    %607 = vmatmul.mubr.f32.gmra.mrb[0].mxu0 %v538
    %v608 = vpop.f32.mrb[0].mxu0
    %v609 = vadd.f32 0.0, %v608
    %v610 = vpop.f32.mrb[0].mxu0
    %611 = vdwg.mxu0
    %612 = vrot.lane.b32.xlu0 %v150, 120
    %v613 = vpop.permute.xlu0 %612
    %v614 = vsel %vm157, %v150, 0
    %v616 = vsel %vm157, %v613, 0
    %618 = vmatprep.subr.mxu0 0.0
    %619 = vmatpush1.xpose.msra.mxu0 %v616
    %620 = vmatprep.subr.mxu0 0.0
    %621 = vmatpush1.xpose.msra.mxu0 0.0
    %622 = vmatprep.subr.mxu0 0.0
    %623 = vmatpush1.xpose.msra.mxu0 0.0
    %624 = vmatprep.subr.mxu0 0.0
    %625 = vmatpush1.xpose.msra.mxu0 0.0
    %626 = vmatprep.subr.mxu0 0.0
    %627 = vmatpush1.xpose.msra.mxu0 0.0
    %628 = vmatprep.subr.mxu0 0.0
    %629 = vmatpush1.xpose.msra.mxu0 0.0
    %630 = vmatprep.subr.mxu0 0.0
    %631 = vmatpush1.xpose.msra.mxu0 0.0
    %632 = vmatprep.subr.mxu0 0.0
    %633 = vmatpush1.xpose.msra.mxu0 0.0
    %634 = vmatprep.subr.mxu0 0.0
    %635 = vmatpush1.xpose.msra.mxu0 0.0
    %636 = vmatprep.subr.mxu0 0.0
    %637 = vmatpush1.xpose.msra.mxu0 0.0
    %638 = vmatprep.subr.mxu0 0.0
    %639 = vmatpush1.xpose.msra.mxu0 0.0
    %640 = vmatprep.subr.mxu0 0.0
    %641 = vmatpush1.xpose.msra.mxu0 0.0
    %642 = vmatprep.subr.mxu0 0.0
    %643 = vmatpush1.xpose.msra.mxu0 0.0
    %644 = vmatprep.subr.mxu0 0.0
    %645 = vmatpush1.xpose.msra.mxu0 0.0
    %646 = vmatprep.subr.mxu0 0.0
    %647 = vmatpush1.xpose.msra.mxu0 0.0
    %648 = vmatprep.subr.mxu0 0.0
    %649 = vmatpush1.xpose.msra.mxu0 0.0
    %650 = vmatprep.subr.mxu0 0.0
    %651 = vmatpush1.xpose.msra.mxu0 0.0
    %652 = vmatprep.subr.mxu0 0.0
    %653 = vmatpush1.xpose.msra.mxu0 0.0
    %654 = vmatprep.subr.mxu0 0.0
    %655 = vmatpush1.xpose.msra.mxu0 0.0
    %656 = vmatprep.subr.mxu0 0.0
    %657 = vmatpush1.xpose.msra.mxu0 0.0
    %658 = vmatprep.subr.mxu0 0.0
    %659 = vmatpush1.xpose.msra.mxu0 0.0
    %660 = vmatprep.subr.mxu0 0.0
    %661 = vmatpush1.xpose.msra.mxu0 0.0
    %662 = vmatprep.subr.mxu0 0.0
    %663 = vmatpush1.xpose.msra.mxu0 0.0
    %664 = vmatprep.subr.mxu0 0.0
    %665 = vmatpush1.xpose.msra.mxu0 0.0
    %666 = vmatprep.subr.mxu0 0.0
    %667 = vmatpush1.xpose.msra.mxu0 0.0
    %668 = vmatprep.subr.mxu0 0.0
    %669 = vmatpush1.xpose.msra.mxu0 0.0
    %670 = vmatprep.subr.mxu0 0.0
    %671 = vmatpush1.xpose.msra.mxu0 0.0
    %672 = vmatprep.subr.mxu0 0.0
    %673 = vmatpush1.xpose.msra.mxu0 0.0
    %674 = vmatprep.subr.mxu0 0.0
    %675 = vmatpush1.xpose.msra.mxu0 0.0
    %676 = vmatprep.subr.mxu0 0.0
    %677 = vmatpush1.xpose.msra.mxu0 0.0
    %678 = vmatprep.subr.mxu0 0.0
    %679 = vmatpush1.xpose.msra.mxu0 0.0
    %680 = vmatprep.subr.mxu0 0.0
    %681 = vmatpush1.xpose.msra.mxu0 0.0
    %682 = vmatprep.mubr.f32.mxu0 0.0
    %683 = vmatmul.mubr.f32.gmra.mrb[0].mxu0 %v614
    %v684 = vpop.f32.mrb[0].mxu0
    %v685 = vadd.f32 0.0, %v684
    %v686 = vpop.f32.mrb[0].mxu0
    %687 = vdwg.mxu0
    %688 = vrot.lane.b32.xlu0 %v154, 120
    %v689 = vpop.permute.xlu0 %688
    %v690 = vsel %vm157, %v154, 0
    %v692 = vsel %vm157, %v689, 0
    %694 = vmatprep.subr.mxu0 0.0
    %695 = vmatpush1.xpose.msra.mxu0 %v692
    %696 = vmatprep.subr.mxu0 0.0
    %697 = vmatpush1.xpose.msra.mxu0 0.0
    %698 = vmatprep.subr.mxu0 0.0
    %699 = vmatpush1.xpose.msra.mxu0 0.0
    %700 = vmatprep.subr.mxu0 0.0
    %701 = vmatpush1.xpose.msra.mxu0 0.0
    %702 = vmatprep.subr.mxu0 0.0
    %703 = vmatpush1.xpose.msra.mxu0 0.0
    %704 = vmatprep.subr.mxu0 0.0
    %705 = vmatpush1.xpose.msra.mxu0 0.0
    %706 = vmatprep.subr.mxu0 0.0
    %707 = vmatpush1.xpose.msra.mxu0 0.0
    %708 = vmatprep.subr.mxu0 0.0
    %709 = vmatpush1.xpose.msra.mxu0 0.0
    %710 = vmatprep.subr.mxu0 0.0
    %711 = vmatpush1.xpose.msra.mxu0 0.0
    %712 = vmatprep.subr.mxu0 0.0
    %713 = vmatpush1.xpose.msra.mxu0 0.0
    %714 = vmatprep.subr.mxu0 0.0
    %715 = vmatpush1.xpose.msra.mxu0 0.0
    %716 = vmatprep.subr.mxu0 0.0
    %717 = vmatpush1.xpose.msra.mxu0 0.0
    %718 = vmatprep.subr.mxu0 0.0
    %719 = vmatpush1.xpose.msra.mxu0 0.0
    %720 = vmatprep.subr.mxu0 0.0
    %721 = vmatpush1.xpose.msra.mxu0 0.0
    %722 = vmatprep.subr.mxu0 0.0
    %723 = vmatpush1.xpose.msra.mxu0 0.0
    %724 = vmatprep.subr.mxu0 0.0
    %725 = vmatpush1.xpose.msra.mxu0 0.0
    %726 = vmatprep.subr.mxu0 0.0
    %727 = vmatpush1.xpose.msra.mxu0 0.0
    %728 = vmatprep.subr.mxu0 0.0
    %729 = vmatpush1.xpose.msra.mxu0 0.0
    %730 = vmatprep.subr.mxu0 0.0
    %731 = vmatpush1.xpose.msra.mxu0 0.0
    %732 = vmatprep.subr.mxu0 0.0
    %733 = vmatpush1.xpose.msra.mxu0 0.0
    %734 = vmatprep.subr.mxu0 0.0
    %735 = vmatpush1.xpose.msra.mxu0 0.0
    %736 = vmatprep.subr.mxu0 0.0
    %737 = vmatpush1.xpose.msra.mxu0 0.0
    %738 = vmatprep.subr.mxu0 0.0
    %739 = vmatpush1.xpose.msra.mxu0 0.0
    %740 = vmatprep.subr.mxu0 0.0
    %741 = vmatpush1.xpose.msra.mxu0 0.0
    %742 = vmatprep.subr.mxu0 0.0
    %743 = vmatpush1.xpose.msra.mxu0 0.0
    %744 = vmatprep.subr.mxu0 0.0
    %745 = vmatpush1.xpose.msra.mxu0 0.0
    %746 = vmatprep.subr.mxu0 0.0
    %747 = vmatpush1.xpose.msra.mxu0 0.0
    %748 = vmatprep.subr.mxu0 0.0
    %749 = vmatpush1.xpose.msra.mxu0 0.0
    %750 = vmatprep.subr.mxu0 0.0
    %751 = vmatpush1.xpose.msra.mxu0 0.0
    %752 = vmatprep.subr.mxu0 0.0
    %753 = vmatpush1.xpose.msra.mxu0 0.0
    %754 = vmatprep.subr.mxu0 0.0
    %755 = vmatpush1.xpose.msra.mxu0 0.0
    %756 = vmatprep.subr.mxu0 0.0
    %757 = vmatpush1.xpose.msra.mxu0 0.0
    %758 = vmatprep.mubr.f32.mxu0 0.0
    %759 = vmatmul.mubr.f32.gmra.mrb[0].mxu0 %v690
    %v760 = vpop.f32.mrb[0].mxu0
    %v761 = vadd.f32 0.0, %v760
    %v762 = vpop.f32.mrb[0].mxu0
    %763 = vdwg.mxu0
    %v764 = vmul.f32 %v229, 0.35355338
    %v765 = vmul.f32 %v305, 0.35355338
    %v766 = vmul.f32 %v381, 0.35355338
    %v767 = vmul.f32 %v457, 0.35355338
    %v768 = vmul.f32 %v533, 0.35355338
    %v769 = vmul.f32 %v609, 0.35355338
    %v770 = vmul.f32 %v685, 0.35355338
    %v771 = vmul.f32 %v761, 0.35355338
    %v772 = vsel %vm157, %v764, -inf
    %773 = vmax.xlane.f32.xlu0 %v772
    %v774 = vpop.xlane.xlu0 %773
    %v775 = vsel %vm157, %v765, -inf
    %776 = vmax.xlane.f32.xlu0 %v775
    %v777 = vpop.xlane.xlu0 %776
    %v778 = vsel %vm157, %v766, -inf
    %779 = vmax.xlane.f32.xlu0 %v778
    %v780 = vpop.xlane.xlu0 %779
    %v781 = vsel %vm157, %v767, -inf
    %782 = vmax.xlane.f32.xlu0 %v781
    %v783 = vpop.xlane.xlu0 %782
    %v784 = vsel %vm157, %v768, -inf
    %785 = vmax.xlane.f32.xlu0 %v784
    %v786 = vpop.xlane.xlu0 %785
    %v787 = vsel %vm157, %v769, -inf
    %788 = vmax.xlane.f32.xlu0 %v787
    %v789 = vpop.xlane.xlu0 %788
    %v790 = vsel %vm157, %v770, -inf
    %791 = vmax.xlane.f32.xlu0 %v790
    %v792 = vpop.xlane.xlu0 %791
    %v793 = vsel %vm157, %v771, -inf
    %794 = vmax.xlane.f32.xlu0 %v793
    %v795 = vpop.xlane.xlu0 %794
    %v796 = vsub.f32 %v764, %v774
    %v797 = vsub.f32 %v765, %v777
    %v798 = vsub.f32 %v766, %v780
    %v799 = vsub.f32 %v767, %v783
    %v800 = vsub.f32 %v768, %v786
    %v801 = vsub.f32 %v769, %v789
    %v802 = vsub.f32 %v770, %v792
    %v803 = vsub.f32 %v771, %v795
    %v804 = vmul.f32 %v796, 1.442695
    %v805 = vpow.pop %v804
    %v806 = vmul.f32 %v797, 1.442695
    %v807 = vpow.pop %v806
    %v808 = vmul.f32 %v798, 1.442695
    %v809 = vpow.pop %v808
    %v810 = vmul.f32 %v799, 1.442695
    %v811 = vpow.pop %v810
    %v812 = vmul.f32 %v800, 1.442695
    %v813 = vpow.pop %v812
    %v814 = vmul.f32 %v801, 1.442695
    %v815 = vpow.pop %v814
    %v816 = vmul.f32 %v802, 1.442695
    %v817 = vpow.pop %v816
    %v818 = vmul.f32 %v803, 1.442695
    %v819 = vpow.pop %v818
    %v820 = vsel %vm157, %v805, 0.0
    %821 = vadd.xlane.f32.xlu0 %v820
    %v822 = vpop.xlane.xlu0 %821
    %v823 = vsel %vm157, %v807, 0.0
    %824 = vadd.xlane.f32.xlu0 %v823
    %v825 = vpop.xlane.xlu0 %824
    %v826 = vsel %vm157, %v809, 0.0
    %827 = vadd.xlane.f32.xlu0 %v826
    %v828 = vpop.xlane.xlu0 %827
    %v829 = vsel %vm157, %v811, 0.0
    %830 = vadd.xlane.f32.xlu0 %v829
    %v831 = vpop.xlane.xlu0 %830
    %v832 = vsel %vm157, %v813, 0.0
    %833 = vadd.xlane.f32.xlu0 %v832
    %v834 = vpop.xlane.xlu0 %833
    %v835 = vsel %vm157, %v815, 0.0
    %836 = vadd.xlane.f32.xlu0 %v835
    %v837 = vpop.xlane.xlu0 %836
    %v838 = vsel %vm157, %v817, 0.0
    %839 = vadd.xlane.f32.xlu0 %v838
    %v840 = vpop.xlane.xlu0 %839
    %v841 = vsel %vm157, %v819, 0.0
    %842 = vadd.xlane.f32.xlu0 %v841
    %v843 = vpop.xlane.xlu0 %842
    %v844 = vrcp.pop %v822
    %v845 = vrcp.pop %v825
    %v846 = vrcp.pop %v828
    %v847 = vrcp.pop %v831
    %v848 = vrcp.pop %v834
    %v849 = vrcp.pop %v837
    %v850 = vrcp.pop %v840
    %v851 = vrcp.pop %v843
    %v852 = vmul.f32 %v805, %v844
    %v853 = vmul.f32 %v807, %v845
    %v854 = vmul.f32 %v809, %v846
    %v855 = vmul.f32 %v811, %v847
    %v856 = vmul.f32 %v813, %v848
    %v857 = vmul.f32 %v815, %v849
    %v858 = vmul.f32 %v817, %v850
    %v859 = vmul.f32 %v819, %v851
    %860 = vrot.lane.b32.xlu0 %v133, 112
    %v861 = vpop.permute.xlu0 %860
    %v864 = vsel %vm157, %v852, 0
    %866 = vmatprep.subr.mxu0 0.0
    %867 = vmatpush1.msra.mxu0 %v861
    %868 = vmatprep.subr.mxu0 0.0
    %869 = vmatpush1.msra.mxu0 0.0
    %870 = vmatprep.subr.mxu0 0.0
    %871 = vmatpush1.msra.mxu0 0.0
    %872 = vmatprep.subr.mxu0 0.0
    %873 = vmatpush1.msra.mxu0 0.0
    %874 = vmatprep.subr.mxu0 0.0
    %875 = vmatpush1.msra.mxu0 0.0
    %876 = vmatprep.subr.mxu0 0.0
    %877 = vmatpush1.msra.mxu0 0.0
    %878 = vmatprep.subr.mxu0 0.0
    %879 = vmatpush1.msra.mxu0 0.0
    %880 = vmatprep.subr.mxu0 0.0
    %881 = vmatpush1.msra.mxu0 0.0
    %882 = vmatprep.subr.mxu0 0.0
    %883 = vmatpush1.msra.mxu0 0.0
    %884 = vmatprep.subr.mxu0 0.0
    %885 = vmatpush1.msra.mxu0 0.0
    %886 = vmatprep.subr.mxu0 0.0
    %887 = vmatpush1.msra.mxu0 0.0
    %888 = vmatprep.subr.mxu0 0.0
    %889 = vmatpush1.msra.mxu0 0.0
    %890 = vmatprep.subr.mxu0 0.0
    %891 = vmatpush1.msra.mxu0 0.0
    %892 = vmatprep.subr.mxu0 0.0
    %893 = vmatpush1.msra.mxu0 0.0
    %894 = vmatprep.subr.mxu0 0.0
    %895 = vmatpush1.msra.mxu0 0.0
    %896 = vmatprep.subr.mxu0 0.0
    %897 = vmatpush1.msra.mxu0 0.0
    %898 = vmatprep.subr.mxu0 0.0
    %899 = vmatpush1.msra.mxu0 0.0
    %900 = vmatprep.subr.mxu0 0.0
    %901 = vmatpush1.msra.mxu0 0.0
    %902 = vmatprep.subr.mxu0 0.0
    %903 = vmatpush1.msra.mxu0 0.0
    %904 = vmatprep.subr.mxu0 0.0
    %905 = vmatpush1.msra.mxu0 0.0
    %906 = vmatprep.subr.mxu0 0.0
    %907 = vmatpush1.msra.mxu0 0.0
    %908 = vmatprep.subr.mxu0 0.0
    %909 = vmatpush1.msra.mxu0 0.0
    %910 = vmatprep.subr.mxu0 0.0
    %911 = vmatpush1.msra.mxu0 0.0
    %912 = vmatprep.subr.mxu0 0.0
    %913 = vmatpush1.msra.mxu0 0.0
    %914 = vmatprep.subr.mxu0 0.0
    %915 = vmatpush1.msra.mxu0 0.0
    %916 = vmatprep.subr.mxu0 0.0
    %917 = vmatpush1.msra.mxu0 0.0
    %918 = vmatprep.subr.mxu0 0.0
    %919 = vmatpush1.msra.mxu0 0.0
    %920 = vmatprep.subr.mxu0 0.0
    %921 = vmatpush1.msra.mxu0 0.0
    %922 = vmatprep.subr.mxu0 0.0
    %923 = vmatpush1.msra.mxu0 0.0
    %924 = vmatprep.subr.mxu0 0.0
    %925 = vmatpush1.msra.mxu0 0.0
    %926 = vmatprep.subr.mxu0 0.0
    %927 = vmatpush1.msra.mxu0 0.0
    %928 = vmatprep.subr.mxu0 0.0
    %929 = vmatpush1.msra.mxu0 0.0
    %930 = vmatprep.mubr.f32.mxu0 0.0
    %931 = vmatmul.mubr.f32.gmra.mrb[0].mxu0 %v864
    %v932 = vpop.f32.mrb[0].mxu0
    %v933 = vadd.f32 0.0, %v932
    %v934 = vpop.f32.mrb[0].mxu0
    %935 = vdwg.mxu0
    %936 = vrot.lane.b32.xlu0 %v144, 112
    %v937 = vpop.permute.xlu0 %936
    %v940 = vsel %vm157, %v853, 0
    %942 = vmatprep.subr.mxu0 0.0
    %943 = vmatpush1.msra.mxu0 %v937
    %944 = vmatprep.subr.mxu0 0.0
    %945 = vmatpush1.msra.mxu0 0.0
    %946 = vmatprep.subr.mxu0 0.0
    %947 = vmatpush1.msra.mxu0 0.0
    %948 = vmatprep.subr.mxu0 0.0
    %949 = vmatpush1.msra.mxu0 0.0
    %950 = vmatprep.subr.mxu0 0.0
    %951 = vmatpush1.msra.mxu0 0.0
    %952 = vmatprep.subr.mxu0 0.0
    %953 = vmatpush1.msra.mxu0 0.0
    %954 = vmatprep.subr.mxu0 0.0
    %955 = vmatpush1.msra.mxu0 0.0
    %956 = vmatprep.subr.mxu0 0.0
    %957 = vmatpush1.msra.mxu0 0.0
    %958 = vmatprep.subr.mxu0 0.0
    %959 = vmatpush1.msra.mxu0 0.0
    %960 = vmatprep.subr.mxu0 0.0
    %961 = vmatpush1.msra.mxu0 0.0
    %962 = vmatprep.subr.mxu0 0.0
    %963 = vmatpush1.msra.mxu0 0.0
    %964 = vmatprep.subr.mxu0 0.0
    %965 = vmatpush1.msra.mxu0 0.0
    %966 = vmatprep.subr.mxu0 0.0
    %967 = vmatpush1.msra.mxu0 0.0
    %968 = vmatprep.subr.mxu0 0.0
    %969 = vmatpush1.msra.mxu0 0.0
    %970 = vmatprep.subr.mxu0 0.0
    %971 = vmatpush1.msra.mxu0 0.0
    %972 = vmatprep.subr.mxu0 0.0
    %973 = vmatpush1.msra.mxu0 0.0
    %974 = vmatprep.subr.mxu0 0.0
    %975 = vmatpush1.msra.mxu0 0.0
    %976 = vmatprep.subr.mxu0 0.0
    %977 = vmatpush1.msra.mxu0 0.0
    %978 = vmatprep.subr.mxu0 0.0
    %979 = vmatpush1.msra.mxu0 0.0
    %980 = vmatprep.subr.mxu0 0.0
    %981 = vmatpush1.msra.mxu0 0.0
    %982 = vmatprep.subr.mxu0 0.0
    %983 = vmatpush1.msra.mxu0 0.0
    %984 = vmatprep.subr.mxu0 0.0
    %985 = vmatpush1.msra.mxu0 0.0
    %986 = vmatprep.subr.mxu0 0.0
    %987 = vmatpush1.msra.mxu0 0.0
    %988 = vmatprep.subr.mxu0 0.0
    %989 = vmatpush1.msra.mxu0 0.0
    %990 = vmatprep.subr.mxu0 0.0
    %991 = vmatpush1.msra.mxu0 0.0
    %992 = vmatprep.subr.mxu0 0.0
    %993 = vmatpush1.msra.mxu0 0.0
    %994 = vmatprep.subr.mxu0 0.0
    %995 = vmatpush1.msra.mxu0 0.0
    %996 = vmatprep.subr.mxu0 0.0
    %997 = vmatpush1.msra.mxu0 0.0
    %998 = vmatprep.subr.mxu0 0.0
    %999 = vmatpush1.msra.mxu0 0.0
    %1000 = vmatprep.subr.mxu0 0.0
    %1001 = vmatpush1.msra.mxu0 0.0
    %1002 = vmatprep.subr.mxu0 0.0
    %1003 = vmatpush1.msra.mxu0 0.0
    %1004 = vmatprep.subr.mxu0 0.0
    %1005 = vmatpush1.msra.mxu0 0.0
    %1006 = vmatprep.mubr.f32.mxu0 0.0
    %1007 = vmatmul.mubr.f32.gmra.mrb[0].mxu0 %v940
    %v1008 = vpop.f32.mrb[0].mxu0
    %v1009 = vadd.f32 0.0, %v1008
    %v1010 = vpop.f32.mrb[0].mxu0
    %1011 = vdwg.mxu0
    %1012 = vrot.lane.b32.xlu0 %v148, 112
    %v1013 = vpop.permute.xlu0 %1012
    %v1016 = vsel %vm157, %v854, 0
    %1018 = vmatprep.subr.mxu0 0.0
    %1019 = vmatpush1.msra.mxu0 %v1013
    %1020 = vmatprep.subr.mxu0 0.0
    %1021 = vmatpush1.msra.mxu0 0.0
    %1022 = vmatprep.subr.mxu0 0.0
    %1023 = vmatpush1.msra.mxu0 0.0
    %1024 = vmatprep.subr.mxu0 0.0
    %1025 = vmatpush1.msra.mxu0 0.0
    %1026 = vmatprep.subr.mxu0 0.0
    %1027 = vmatpush1.msra.mxu0 0.0
    %1028 = vmatprep.subr.mxu0 0.0
    %1029 = vmatpush1.msra.mxu0 0.0
    %1030 = vmatprep.subr.mxu0 0.0
    %1031 = vmatpush1.msra.mxu0 0.0
    %1032 = vmatprep.subr.mxu0 0.0
    %1033 = vmatpush1.msra.mxu0 0.0
    %1034 = vmatprep.subr.mxu0 0.0
    %1035 = vmatpush1.msra.mxu0 0.0
    %1036 = vmatprep.subr.mxu0 0.0
    %1037 = vmatpush1.msra.mxu0 0.0
    %1038 = vmatprep.subr.mxu0 0.0
    %1039 = vmatpush1.msra.mxu0 0.0
    %1040 = vmatprep.subr.mxu0 0.0
    %1041 = vmatpush1.msra.mxu0 0.0
    %1042 = vmatprep.subr.mxu0 0.0
    %1043 = vmatpush1.msra.mxu0 0.0
    %1044 = vmatprep.subr.mxu0 0.0
    %1045 = vmatpush1.msra.mxu0 0.0
    %1046 = vmatprep.subr.mxu0 0.0
    %1047 = vmatpush1.msra.mxu0 0.0
    %1048 = vmatprep.subr.mxu0 0.0
    %1049 = vmatpush1.msra.mxu0 0.0
    %1050 = vmatprep.subr.mxu0 0.0
    %1051 = vmatpush1.msra.mxu0 0.0
    %1052 = vmatprep.subr.mxu0 0.0
    %1053 = vmatpush1.msra.mxu0 0.0
    %1054 = vmatprep.subr.mxu0 0.0
    %1055 = vmatpush1.msra.mxu0 0.0
    %1056 = vmatprep.subr.mxu0 0.0
    %1057 = vmatpush1.msra.mxu0 0.0
    %1058 = vmatprep.subr.mxu0 0.0
    %1059 = vmatpush1.msra.mxu0 0.0
    %1060 = vmatprep.subr.mxu0 0.0
    %1061 = vmatpush1.msra.mxu0 0.0
    %1062 = vmatprep.subr.mxu0 0.0
    %1063 = vmatpush1.msra.mxu0 0.0
    %1064 = vmatprep.subr.mxu0 0.0
    %1065 = vmatpush1.msra.mxu0 0.0
    %1066 = vmatprep.subr.mxu0 0.0
    %1067 = vmatpush1.msra.mxu0 0.0
    %1068 = vmatprep.subr.mxu0 0.0
    %1069 = vmatpush1.msra.mxu0 0.0
    %1070 = vmatprep.subr.mxu0 0.0
    %1071 = vmatpush1.msra.mxu0 0.0
    %1072 = vmatprep.subr.mxu0 0.0
    %1073 = vmatpush1.msra.mxu0 0.0
    %1074 = vmatprep.subr.mxu0 0.0
    %1075 = vmatpush1.msra.mxu0 0.0
    %1076 = vmatprep.subr.mxu0 0.0
    %1077 = vmatpush1.msra.mxu0 0.0
    %1078 = vmatprep.subr.mxu0 0.0
    %1079 = vmatpush1.msra.mxu0 0.0
    %1080 = vmatprep.subr.mxu0 0.0
    %1081 = vmatpush1.msra.mxu0 0.0
    %1082 = vmatprep.mubr.f32.mxu0 0.0
    %1083 = vmatmul.mubr.f32.gmra.mrb[0].mxu0 %v1016
    %v1084 = vpop.f32.mrb[0].mxu0
    %v1085 = vadd.f32 0.0, %v1084
    %v1086 = vpop.f32.mrb[0].mxu0
    %1087 = vdwg.mxu0
    %1088 = vrot.lane.b32.xlu0 %v152, 112
    %v1089 = vpop.permute.xlu0 %1088
    %v1092 = vsel %vm157, %v855, 0
    %1094 = vmatprep.subr.mxu0 0.0
    %1095 = vmatpush1.msra.mxu0 %v1089
    %1096 = vmatprep.subr.mxu0 0.0
    %1097 = vmatpush1.msra.mxu0 0.0
    %1098 = vmatprep.subr.mxu0 0.0
    %1099 = vmatpush1.msra.mxu0 0.0
    %1100 = vmatprep.subr.mxu0 0.0
    %1101 = vmatpush1.msra.mxu0 0.0
    %1102 = vmatprep.subr.mxu0 0.0
    %1103 = vmatpush1.msra.mxu0 0.0
    %1104 = vmatprep.subr.mxu0 0.0
    %1105 = vmatpush1.msra.mxu0 0.0
    %1106 = vmatprep.subr.mxu0 0.0
    %1107 = vmatpush1.msra.mxu0 0.0
    %1108 = vmatprep.subr.mxu0 0.0
    %1109 = vmatpush1.msra.mxu0 0.0
    %1110 = vmatprep.subr.mxu0 0.0
    %1111 = vmatpush1.msra.mxu0 0.0
    %1112 = vmatprep.subr.mxu0 0.0
    %1113 = vmatpush1.msra.mxu0 0.0
    %1114 = vmatprep.subr.mxu0 0.0
    %1115 = vmatpush1.msra.mxu0 0.0
    %1116 = vmatprep.subr.mxu0 0.0
    %1117 = vmatpush1.msra.mxu0 0.0
    %1118 = vmatprep.subr.mxu0 0.0
    %1119 = vmatpush1.msra.mxu0 0.0
    %1120 = vmatprep.subr.mxu0 0.0
    %1121 = vmatpush1.msra.mxu0 0.0
    %1122 = vmatprep.subr.mxu0 0.0
    %1123 = vmatpush1.msra.mxu0 0.0
    %1124 = vmatprep.subr.mxu0 0.0
    %1125 = vmatpush1.msra.mxu0 0.0
    %1126 = vmatprep.subr.mxu0 0.0
    %1127 = vmatpush1.msra.mxu0 0.0
    %1128 = vmatprep.subr.mxu0 0.0
    %1129 = vmatpush1.msra.mxu0 0.0
    %1130 = vmatprep.subr.mxu0 0.0
    %1131 = vmatpush1.msra.mxu0 0.0
    %1132 = vmatprep.subr.mxu0 0.0
    %1133 = vmatpush1.msra.mxu0 0.0
    %1134 = vmatprep.subr.mxu0 0.0
    %1135 = vmatpush1.msra.mxu0 0.0
    %1136 = vmatprep.subr.mxu0 0.0
    %1137 = vmatpush1.msra.mxu0 0.0
    %1138 = vmatprep.subr.mxu0 0.0
    %1139 = vmatpush1.msra.mxu0 0.0
    %1140 = vmatprep.subr.mxu0 0.0
    %1141 = vmatpush1.msra.mxu0 0.0
    %1142 = vmatprep.subr.mxu0 0.0
    %1143 = vmatpush1.msra.mxu0 0.0
    %1144 = vmatprep.subr.mxu0 0.0
    %1145 = vmatpush1.msra.mxu0 0.0
    %1146 = vmatprep.subr.mxu0 0.0
    %1147 = vmatpush1.msra.mxu0 0.0
    %1148 = vmatprep.subr.mxu0 0.0
    %1149 = vmatpush1.msra.mxu0 0.0
    %1150 = vmatprep.subr.mxu0 0.0
    %1151 = vmatpush1.msra.mxu0 0.0
    %1152 = vmatprep.subr.mxu0 0.0
    %1153 = vmatpush1.msra.mxu0 0.0
    %1154 = vmatprep.subr.mxu0 0.0
    %1155 = vmatpush1.msra.mxu0 0.0
    %1156 = vmatprep.subr.mxu0 0.0
    %1157 = vmatpush1.msra.mxu0 0.0
    %1158 = vmatprep.mubr.f32.mxu0 0.0
    %1159 = vmatmul.mubr.f32.gmra.mrb[0].mxu0 %v1092
    %v1160 = vpop.f32.mrb[0].mxu0
    %v1161 = vadd.f32 0.0, %v1160
    %v1162 = vpop.f32.mrb[0].mxu0
    %1163 = vdwg.mxu0
    %1164 = vrot.lane.b32.xlu0 %v138, 112
    %v1165 = vpop.permute.xlu0 %1164
    %v1168 = vsel %vm157, %v856, 0
    %1170 = vmatprep.subr.mxu0 0.0
    %1171 = vmatpush1.msra.mxu0 %v1165
    %1172 = vmatprep.subr.mxu0 0.0
    %1173 = vmatpush1.msra.mxu0 0.0
    %1174 = vmatprep.subr.mxu0 0.0
    %1175 = vmatpush1.msra.mxu0 0.0
    %1176 = vmatprep.subr.mxu0 0.0
    %1177 = vmatpush1.msra.mxu0 0.0
    %1178 = vmatprep.subr.mxu0 0.0
    %1179 = vmatpush1.msra.mxu0 0.0
    %1180 = vmatprep.subr.mxu0 0.0
    %1181 = vmatpush1.msra.mxu0 0.0
    %1182 = vmatprep.subr.mxu0 0.0
    %1183 = vmatpush1.msra.mxu0 0.0
    %1184 = vmatprep.subr.mxu0 0.0
    %1185 = vmatpush1.msra.mxu0 0.0
    %1186 = vmatprep.subr.mxu0 0.0
    %1187 = vmatpush1.msra.mxu0 0.0
    %1188 = vmatprep.subr.mxu0 0.0
    %1189 = vmatpush1.msra.mxu0 0.0
    %1190 = vmatprep.subr.mxu0 0.0
    %1191 = vmatpush1.msra.mxu0 0.0
    %1192 = vmatprep.subr.mxu0 0.0
    %1193 = vmatpush1.msra.mxu0 0.0
    %1194 = vmatprep.subr.mxu0 0.0
    %1195 = vmatpush1.msra.mxu0 0.0
    %1196 = vmatprep.subr.mxu0 0.0
    %1197 = vmatpush1.msra.mxu0 0.0
    %1198 = vmatprep.subr.mxu0 0.0
    %1199 = vmatpush1.msra.mxu0 0.0
    %1200 = vmatprep.subr.mxu0 0.0
    %1201 = vmatpush1.msra.mxu0 0.0
    %1202 = vmatprep.subr.mxu0 0.0
    %1203 = vmatpush1.msra.mxu0 0.0
    %1204 = vmatprep.subr.mxu0 0.0
    %1205 = vmatpush1.msra.mxu0 0.0
    %1206 = vmatprep.subr.mxu0 0.0
    %1207 = vmatpush1.msra.mxu0 0.0
    %1208 = vmatprep.subr.mxu0 0.0
    %1209 = vmatpush1.msra.mxu0 0.0
    %1210 = vmatprep.subr.mxu0 0.0
    %1211 = vmatpush1.msra.mxu0 0.0
    %1212 = vmatprep.subr.mxu0 0.0
    %1213 = vmatpush1.msra.mxu0 0.0
    %1214 = vmatprep.subr.mxu0 0.0
    %1215 = vmatpush1.msra.mxu0 0.0
    %1216 = vmatprep.subr.mxu0 0.0
    %1217 = vmatpush1.msra.mxu0 0.0
    %1218 = vmatprep.subr.mxu0 0.0
    %1219 = vmatpush1.msra.mxu0 0.0
    %1220 = vmatprep.subr.mxu0 0.0
    %1221 = vmatpush1.msra.mxu0 0.0
    %1222 = vmatprep.subr.mxu0 0.0
    %1223 = vmatpush1.msra.mxu0 0.0
    %1224 = vmatprep.subr.mxu0 0.0
    %1225 = vmatpush1.msra.mxu0 0.0
    %1226 = vmatprep.subr.mxu0 0.0
    %1227 = vmatpush1.msra.mxu0 0.0
    %1228 = vmatprep.subr.mxu0 0.0
    %1229 = vmatpush1.msra.mxu0 0.0
    %1230 = vmatprep.subr.mxu0 0.0
    %1231 = vmatpush1.msra.mxu0 0.0
    %1232 = vmatprep.subr.mxu0 0.0
    %1233 = vmatpush1.msra.mxu0 0.0
    %1234 = vmatprep.mubr.f32.mxu0 0.0
    %1235 = vmatmul.mubr.f32.gmra.mrb[0].mxu0 %v1168
    %v1236 = vpop.f32.mrb[0].mxu0
    %v1237 = vadd.f32 0.0, %v1236
    %v1238 = vpop.f32.mrb[0].mxu0
    %1239 = vdwg.mxu0
    %1240 = vrot.lane.b32.xlu0 %v146, 112
    %v1241 = vpop.permute.xlu0 %1240
    %v1244 = vsel %vm157, %v857, 0
    %1246 = vmatprep.subr.mxu0 0.0
    %1247 = vmatpush1.msra.mxu0 %v1241
    %1248 = vmatprep.subr.mxu0 0.0
    %1249 = vmatpush1.msra.mxu0 0.0
    %1250 = vmatprep.subr.mxu0 0.0
    %1251 = vmatpush1.msra.mxu0 0.0
    %1252 = vmatprep.subr.mxu0 0.0
    %1253 = vmatpush1.msra.mxu0 0.0
    %1254 = vmatprep.subr.mxu0 0.0
    %1255 = vmatpush1.msra.mxu0 0.0
    %1256 = vmatprep.subr.mxu0 0.0
    %1257 = vmatpush1.msra.mxu0 0.0
    %1258 = vmatprep.subr.mxu0 0.0
    %1259 = vmatpush1.msra.mxu0 0.0
    %1260 = vmatprep.subr.mxu0 0.0
    %1261 = vmatpush1.msra.mxu0 0.0
    %1262 = vmatprep.subr.mxu0 0.0
    %1263 = vmatpush1.msra.mxu0 0.0
    %1264 = vmatprep.subr.mxu0 0.0
    %1265 = vmatpush1.msra.mxu0 0.0
    %1266 = vmatprep.subr.mxu0 0.0
    %1267 = vmatpush1.msra.mxu0 0.0
    %1268 = vmatprep.subr.mxu0 0.0
    %1269 = vmatpush1.msra.mxu0 0.0
    %1270 = vmatprep.subr.mxu0 0.0
    %1271 = vmatpush1.msra.mxu0 0.0
    %1272 = vmatprep.subr.mxu0 0.0
    %1273 = vmatpush1.msra.mxu0 0.0
    %1274 = vmatprep.subr.mxu0 0.0
    %1275 = vmatpush1.msra.mxu0 0.0
    %1276 = vmatprep.subr.mxu0 0.0
    %1277 = vmatpush1.msra.mxu0 0.0
    %1278 = vmatprep.subr.mxu0 0.0
    %1279 = vmatpush1.msra.mxu0 0.0
    %1280 = vmatprep.subr.mxu0 0.0
    %1281 = vmatpush1.msra.mxu0 0.0
    %1282 = vmatprep.subr.mxu0 0.0
    %1283 = vmatpush1.msra.mxu0 0.0
    %1284 = vmatprep.subr.mxu0 0.0
    %1285 = vmatpush1.msra.mxu0 0.0
    %1286 = vmatprep.subr.mxu0 0.0
    %1287 = vmatpush1.msra.mxu0 0.0
    %1288 = vmatprep.subr.mxu0 0.0
    %1289 = vmatpush1.msra.mxu0 0.0
    %1290 = vmatprep.subr.mxu0 0.0
    %1291 = vmatpush1.msra.mxu0 0.0
    %1292 = vmatprep.subr.mxu0 0.0
    %1293 = vmatpush1.msra.mxu0 0.0
    %1294 = vmatprep.subr.mxu0 0.0
    %1295 = vmatpush1.msra.mxu0 0.0
    %1296 = vmatprep.subr.mxu0 0.0
    %1297 = vmatpush1.msra.mxu0 0.0
    %1298 = vmatprep.subr.mxu0 0.0
    %1299 = vmatpush1.msra.mxu0 0.0
    %1300 = vmatprep.subr.mxu0 0.0
    %1301 = vmatpush1.msra.mxu0 0.0
    %1302 = vmatprep.subr.mxu0 0.0
    %1303 = vmatpush1.msra.mxu0 0.0
    %1304 = vmatprep.subr.mxu0 0.0
    %1305 = vmatpush1.msra.mxu0 0.0
    %1306 = vmatprep.subr.mxu0 0.0
    %1307 = vmatpush1.msra.mxu0 0.0
    %1308 = vmatprep.subr.mxu0 0.0
    %1309 = vmatpush1.msra.mxu0 0.0
    %1310 = vmatprep.mubr.f32.mxu0 0.0
    %1311 = vmatmul.mubr.f32.gmra.mrb[0].mxu0 %v1244
    %v1312 = vpop.f32.mrb[0].mxu0
    %v1313 = vadd.f32 0.0, %v1312
    %v1314 = vpop.f32.mrb[0].mxu0
    %1315 = vdwg.mxu0
    %1316 = vrot.lane.b32.xlu0 %v150, 112
    %v1317 = vpop.permute.xlu0 %1316
    %v1320 = vsel %vm157, %v858, 0
    %1322 = vmatprep.subr.mxu0 0.0
    %1323 = vmatpush1.msra.mxu0 %v1317
    %1324 = vmatprep.subr.mxu0 0.0
    %1325 = vmatpush1.msra.mxu0 0.0
    %1326 = vmatprep.subr.mxu0 0.0
    %1327 = vmatpush1.msra.mxu0 0.0
    %1328 = vmatprep.subr.mxu0 0.0
    %1329 = vmatpush1.msra.mxu0 0.0
    %1330 = vmatprep.subr.mxu0 0.0
    %1331 = vmatpush1.msra.mxu0 0.0
    %1332 = vmatprep.subr.mxu0 0.0
    %1333 = vmatpush1.msra.mxu0 0.0
    %1334 = vmatprep.subr.mxu0 0.0
    %1335 = vmatpush1.msra.mxu0 0.0
    %1336 = vmatprep.subr.mxu0 0.0
    %1337 = vmatpush1.msra.mxu0 0.0
    %1338 = vmatprep.subr.mxu0 0.0
    %1339 = vmatpush1.msra.mxu0 0.0
    %1340 = vmatprep.subr.mxu0 0.0
    %1341 = vmatpush1.msra.mxu0 0.0
    %1342 = vmatprep.subr.mxu0 0.0
    %1343 = vmatpush1.msra.mxu0 0.0
    %1344 = vmatprep.subr.mxu0 0.0
    %1345 = vmatpush1.msra.mxu0 0.0
    %1346 = vmatprep.subr.mxu0 0.0
    %1347 = vmatpush1.msra.mxu0 0.0
    %1348 = vmatprep.subr.mxu0 0.0
    %1349 = vmatpush1.msra.mxu0 0.0
    %1350 = vmatprep.subr.mxu0 0.0
    %1351 = vmatpush1.msra.mxu0 0.0
    %1352 = vmatprep.subr.mxu0 0.0
    %1353 = vmatpush1.msra.mxu0 0.0
    %1354 = vmatprep.subr.mxu0 0.0
    %1355 = vmatpush1.msra.mxu0 0.0
    %1356 = vmatprep.subr.mxu0 0.0
    %1357 = vmatpush1.msra.mxu0 0.0
    %1358 = vmatprep.subr.mxu0 0.0
    %1359 = vmatpush1.msra.mxu0 0.0
    %1360 = vmatprep.subr.mxu0 0.0
    %1361 = vmatpush1.msra.mxu0 0.0
    %1362 = vmatprep.subr.mxu0 0.0
    %1363 = vmatpush1.msra.mxu0 0.0
    %1364 = vmatprep.subr.mxu0 0.0
    %1365 = vmatpush1.msra.mxu0 0.0
    %1366 = vmatprep.subr.mxu0 0.0
    %1367 = vmatpush1.msra.mxu0 0.0
    %1368 = vmatprep.subr.mxu0 0.0
    %1369 = vmatpush1.msra.mxu0 0.0
    %1370 = vmatprep.subr.mxu0 0.0
    %1371 = vmatpush1.msra.mxu0 0.0
    %1372 = vmatprep.subr.mxu0 0.0
    %1373 = vmatpush1.msra.mxu0 0.0
    %1374 = vmatprep.subr.mxu0 0.0
    %1375 = vmatpush1.msra.mxu0 0.0
    %1376 = vmatprep.subr.mxu0 0.0
    %1377 = vmatpush1.msra.mxu0 0.0
    %1378 = vmatprep.subr.mxu0 0.0
    %1379 = vmatpush1.msra.mxu0 0.0
    %1380 = vmatprep.subr.mxu0 0.0
    %1381 = vmatpush1.msra.mxu0 0.0
    %1382 = vmatprep.subr.mxu0 0.0
    %1383 = vmatpush1.msra.mxu0 0.0
    %1384 = vmatprep.subr.mxu0 0.0
    %1385 = vmatpush1.msra.mxu0 0.0
    %1386 = vmatprep.mubr.f32.mxu0 0.0
    %1387 = vmatmul.mubr.f32.gmra.mrb[0].mxu0 %v1320
    %v1388 = vpop.f32.mrb[0].mxu0
    %v1389 = vadd.f32 0.0, %v1388
    %v1390 = vpop.f32.mrb[0].mxu0
    %1391 = vdwg.mxu0
    %1392 = vrot.lane.b32.xlu0 %v154, 112
    %v1393 = vpop.permute.xlu0 %1392
    %v1396 = vsel %vm157, %v859, 0
    %1398 = vmatprep.subr.mxu0 0.0
    %1399 = vmatpush1.msra.mxu0 %v1393
    %1400 = vmatprep.subr.mxu0 0.0
    %1401 = vmatpush1.msra.mxu0 0.0
    %1402 = vmatprep.subr.mxu0 0.0
    %1403 = vmatpush1.msra.mxu0 0.0
    %1404 = vmatprep.subr.mxu0 0.0
    %1405 = vmatpush1.msra.mxu0 0.0
    %1406 = vmatprep.subr.mxu0 0.0
    %1407 = vmatpush1.msra.mxu0 0.0
    %1408 = vmatprep.subr.mxu0 0.0
    %1409 = vmatpush1.msra.mxu0 0.0
    %1410 = vmatprep.subr.mxu0 0.0
    %1411 = vmatpush1.msra.mxu0 0.0
    %1412 = vmatprep.subr.mxu0 0.0
    %1413 = vmatpush1.msra.mxu0 0.0
    %1414 = vmatprep.subr.mxu0 0.0
    %1415 = vmatpush1.msra.mxu0 0.0
    %1416 = vmatprep.subr.mxu0 0.0
    %1417 = vmatpush1.msra.mxu0 0.0
    %1418 = vmatprep.subr.mxu0 0.0
    %1419 = vmatpush1.msra.mxu0 0.0
    %1420 = vmatprep.subr.mxu0 0.0
    %1421 = vmatpush1.msra.mxu0 0.0
    %1422 = vmatprep.subr.mxu0 0.0
    %1423 = vmatpush1.msra.mxu0 0.0
    %1424 = vmatprep.subr.mxu0 0.0
    %1425 = vmatpush1.msra.mxu0 0.0
    %1426 = vmatprep.subr.mxu0 0.0
    %1427 = vmatpush1.msra.mxu0 0.0
    %1428 = vmatprep.subr.mxu0 0.0
    %1429 = vmatpush1.msra.mxu0 0.0
    %1430 = vmatprep.subr.mxu0 0.0
    %1431 = vmatpush1.msra.mxu0 0.0
    %1432 = vmatprep.subr.mxu0 0.0
    %1433 = vmatpush1.msra.mxu0 0.0
    %1434 = vmatprep.subr.mxu0 0.0
    %1435 = vmatpush1.msra.mxu0 0.0
    %1436 = vmatprep.subr.mxu0 0.0
    %1437 = vmatpush1.msra.mxu0 0.0
    %1438 = vmatprep.subr.mxu0 0.0
    %1439 = vmatpush1.msra.mxu0 0.0
    %1440 = vmatprep.subr.mxu0 0.0
    %1441 = vmatpush1.msra.mxu0 0.0
    %1442 = vmatprep.subr.mxu0 0.0
    %1443 = vmatpush1.msra.mxu0 0.0
    %1444 = vmatprep.subr.mxu0 0.0
    %1445 = vmatpush1.msra.mxu0 0.0
    %1446 = vmatprep.subr.mxu0 0.0
    %1447 = vmatpush1.msra.mxu0 0.0
    %1448 = vmatprep.subr.mxu0 0.0
    %1449 = vmatpush1.msra.mxu0 0.0
    %1450 = vmatprep.subr.mxu0 0.0
    %1451 = vmatpush1.msra.mxu0 0.0
    %1452 = vmatprep.subr.mxu0 0.0
    %1453 = vmatpush1.msra.mxu0 0.0
    %1454 = vmatprep.subr.mxu0 0.0
    %1455 = vmatpush1.msra.mxu0 0.0
    %1456 = vmatprep.subr.mxu0 0.0
    %1457 = vmatpush1.msra.mxu0 0.0
    %1458 = vmatprep.subr.mxu0 0.0
    %1459 = vmatpush1.msra.mxu0 0.0
    %1460 = vmatprep.subr.mxu0 0.0
    %1461 = vmatpush1.msra.mxu0 0.0
    %1462 = vmatprep.mubr.f32.mxu0 0.0
    %1463 = vmatmul.mubr.f32.gmra.mrb[0].mxu0 %v1396
    %v1464 = vpop.f32.mrb[0].mxu0
    %v1465 = vadd.f32 0.0, %v1464
    %v1466 = vpop.f32.mrb[0].mxu0
    %1467 = vdwg.mxu0
    %1468 = vst.msk [vmem:[#allocation8] sm:$0xff] %vm157, %v852
    %1469 = vst.msk [vmem:[#allocation8 + $0x8] sm:$0xff] %vm157, %v853
    %1470 = vst.msk [vmem:[#allocation8 + $0x10] sm:$0xff] %vm157, %v854
    %1471 = vst.msk [vmem:[#allocation8 + $0x18] sm:$0xff] %vm157, %v855
    %1472 = vst.msk [vmem:[#allocation8 + $0x20] sm:$0xff] %vm157, %v856
    %1473 = vst.msk [vmem:[#allocation8 + $0x28] sm:$0xff] %vm157, %v857
    %1474 = vst.msk [vmem:[#allocation8 + $0x30] sm:$0xff] %vm157, %v858
    %1475 = vst.msk [vmem:[#allocation8 + $0x38] sm:$0xff] %vm157, %v859
    %1478 = vrot.lane.b32.xlu0 %v1009, 8
    %v1479 = vpop.permute.xlu0 %1478
    %1480 = vrot.lane.b32.xlu0 %v1313, 8
    %v1481 = vpop.permute.xlu0 %1480
    %1486 = vrot.lane.b32.xlu0 %v1085, 16
    %v1487 = vpop.permute.xlu0 %1486
    %1488 = vrot.lane.b32.xlu0 %v1389, 16
    %v1489 = vpop.permute.xlu0 %1488
    %1494 = vrot.lane.b32.xlu0 %v1161, 24
    %v1495 = vpop.permute.xlu0 %1494
    %1496 = vrot.lane.b32.xlu0 %v1465, 24
    %v1497 = vpop.permute.xlu0 %1496
    %v1500 = vsel %vm157, %v933, %v1479
    %v1501 = vsel %vm157, %v1237, %v1481
    %vm1502 = vcmask 130048
    %v1503 = vsel %vm1502, %v1500, %v1487
    %v1504 = vsel %vm1502, %v1501, %v1489
    %vm1505 = vcmask 195584
    %v1506 = vsel %vm1505, %v1503, %v1495
    %v1507 = vsel %vm1505, %v1504, %v1497
    %1512 = vrot.lane.b32.xlu0 %v48, 32
    %v1513 = vpop.permute.xlu0 %1512
    %1514 = vrot.lane.b32.xlu0 %v49, 32
    %v1515 = vpop.permute.xlu0 %1514
    %1516 = vrot.lane.b32.xlu0 %v50, 32
    %v1517 = vpop.permute.xlu0 %1516
    %1518 = vrot.lane.b32.xlu0 %v51, 32
    %v1519 = vpop.permute.xlu0 %1518
    %1524 = vrot.lane.b32.xlu0 %v57, 32
    %v1525 = vpop.permute.xlu0 %1524
    %v1528 = vsel %vm59, %v1506, 0
    %v1531 = vsel %vm59, %v1507, 0
    %1533 = vmatprep.subr.mxu0 0.0
    %1534 = vmatpush1.msra.mxu0 %v1513
    %1535 = vmatprep.subr.mxu0 0.0
    %1536 = vmatpush1.msra.mxu0 %v1515
    %1537 = vmatprep.subr.mxu0 0.0
    %1538 = vmatpush1.msra.mxu0 %v1517
    %1539 = vmatprep.subr.mxu0 0.0
    %1540 = vmatpush1.msra.mxu0 %v1519
    %1541 = vmatprep.subr.mxu0 0.0
    %1542 = vmatpush1.msra.mxu0 0.0
    %1543 = vmatprep.subr.mxu0 0.0
    %1544 = vmatpush1.msra.mxu0 0.0
    %1545 = vmatprep.subr.mxu0 0.0
    %1546 = vmatpush1.msra.mxu0 0.0
    %1547 = vmatprep.subr.mxu0 0.0
    %1548 = vmatpush1.msra.mxu0 0.0
    %1549 = vmatprep.subr.mxu0 0.0
    %1550 = vmatpush1.msra.mxu0 0.0
    %1551 = vmatprep.subr.mxu0 0.0
    %1552 = vmatpush1.msra.mxu0 0.0
    %1553 = vmatprep.subr.mxu0 0.0
    %1554 = vmatpush1.msra.mxu0 0.0
    %1555 = vmatprep.subr.mxu0 0.0
    %1556 = vmatpush1.msra.mxu0 0.0
    %1557 = vmatprep.subr.mxu0 0.0
    %1558 = vmatpush1.msra.mxu0 0.0
    %1559 = vmatprep.subr.mxu0 0.0
    %1560 = vmatpush1.msra.mxu0 0.0
    %1561 = vmatprep.subr.mxu0 0.0
    %1562 = vmatpush1.msra.mxu0 0.0
    %1563 = vmatprep.subr.mxu0 0.0
    %1564 = vmatpush1.msra.mxu0 0.0
    %1565 = vmatprep.subr.mxu0 0.0
    %1566 = vmatpush1.msra.mxu0 0.0
    %1567 = vmatprep.subr.mxu0 0.0
    %1568 = vmatpush1.msra.mxu0 0.0
    %1569 = vmatprep.subr.mxu0 0.0
    %1570 = vmatpush1.msra.mxu0 0.0
    %1571 = vmatprep.subr.mxu0 0.0
    %1572 = vmatpush1.msra.mxu0 0.0
    %1573 = vmatprep.subr.mxu0 0.0
    %1574 = vmatpush1.msra.mxu0 0.0
    %1575 = vmatprep.subr.mxu0 0.0
    %1576 = vmatpush1.msra.mxu0 0.0
    %1577 = vmatprep.subr.mxu0 0.0
    %1578 = vmatpush1.msra.mxu0 0.0
    %1579 = vmatprep.subr.mxu0 0.0
    %1580 = vmatpush1.msra.mxu0 0.0
    %1581 = vmatprep.subr.mxu0 0.0
    %1582 = vmatpush1.msra.mxu0 0.0
    %1583 = vmatprep.subr.mxu0 0.0
    %1584 = vmatpush1.msra.mxu0 0.0
    %1585 = vmatprep.subr.mxu0 0.0
    %1586 = vmatpush1.msra.mxu0 0.0
    %1587 = vmatprep.subr.mxu0 0.0
    %1588 = vmatpush1.msra.mxu0 0.0
    %1589 = vmatprep.subr.mxu0 0.0
    %1590 = vmatpush1.msra.mxu0 0.0
    %1591 = vmatprep.subr.mxu0 0.0
    %1592 = vmatpush1.msra.mxu0 0.0
    %1593 = vmatprep.subr.mxu0 0.0
    %1594 = vmatpush1.msra.mxu0 0.0
    %1595 = vmatprep.subr.mxu0 0.0
    %1596 = vmatpush1.msra.mxu0 0.0
    %1597 = vmatprep.mubr.f32.mxu0 0.0
    %1598 = vmatmul.mubr.f32.gmra.mrb[0].mxu0 %v1528
    %v1599 = vpop.f32.mrb[0].mxu0
    %v1600 = vadd.f32 %v1525, %v1599
    %v1601 = vpop.f32.mrb[0].mxu0
    %1602 = vmatprep.mubr.f32.mxu0 0.0
    %1603 = vmatmul.mubr.f32.gmra.mrb[0].mxu0 %v1531
    %v1604 = vpop.f32.mrb[0].mxu0
    %v1605 = vadd.f32 %v1525, %v1604
    %v1606 = vpop.f32.mrb[0].mxu0
    %1607 = vdwg.mxu0
    %1608 = vst.msk [vmem:[#allocation7] sm:$0xff] %vm59, %v1600
    %1609 = vst.msk [vmem:[#allocation7 + $0x8] sm:$0xff] %vm59, %v1605
    // Predicated region
    $region22: #{siglip_attention.1} parent=1 // pred_check
      _
    $region23: #{siglip_attention.1} parent=1 // pred_check_branch
      %1611 = sbr.rel (0) target = $region25
    $region24: #{siglip_attention.1} parent=1 // pred_region
      %s1613 = ssub.s32 256, 256
      %1614 = vsyncadd [#allocation4], %s1613
      %s1615 = sshll.u32 [#allocation7], 4
      %s1616 = int_to_ptr.vmem [resolvable:$true] %s1615
      %1621 = dma.vmem_to_hbm [thread:$0]  %s1616, 256, %s3, [#allocation4], 128, 128, 8
    $region25: #{siglip_attention.1} parent=1 // pred_fallthru
      _
    // Predicated region
    $region26: #{siglip_attention.1} parent=1 // pred_check
      _
    $region27: #{siglip_attention.1} parent=1 // pred_check_branch
      %1623 = sbr.rel (0) target = $region29
    $region28: #{siglip_attention.1} parent=1 // pred_region
      %s1625 = ssub.s32 1024, 1024
      %1626 = vsyncadd [#allocation9], %s1625
      %s1627 = sshll.u32 [#allocation8], 4
      %s1628 = int_to_ptr.vmem [resolvable:$true] %s1627
      %1633 = dma.vmem_to_hbm [thread:$0]  %s1628, 1024, %s4, [#allocation9], 128, 128, 8
    $region29: #{siglip_attention.1} parent=1 // pred_fallthru
      _
    // Predicated region
    $region30: #{siglip_attention.1} parent=1 // pred_check
      _
    $region31: #{siglip_attention.1} parent=1 // pred_check_branch
      %1635 = sbr.rel (0) target = $region33
    $region32: #{siglip_attention.1} parent=1 // pred_region
      %1636 = dma.done [#allocation4], 256
    $region33: #{siglip_attention.1} parent=1 // pred_fallthru
      _
    // Predicated region
    $region34: #{siglip_attention.1} parent=1 // pred_check
      _
    $region35: #{siglip_attention.1} parent=1 // pred_check_branch
      %1638 = sbr.rel (0) target = $region37
    $region36: #{siglip_attention.1} parent=1 // pred_region
      %1639 = dma.done [#allocation9], 1024
    $region37: #{siglip_attention.1} parent=1 // pred_fallthru
      _
    %1640 = vsyncpa [#allocation3], 1
    %1641 = vsyncpa [#allocation6], 1
    %1642 = vsyncpa [#allocation4], 1
    %1643 = vsyncpa [#allocation9], 1

</llo_original>
